<compile_context>
chip_gen: v5e
topology: v5e:2x2
jax: 0.10.0
libtpu: 0.0.40
codegen_flags: <defaults>
</compile_context>

<pallas_src>
import functools

import jax
import jax.numpy as jnp
from jax.experimental import pallas as pl
from jax.experimental.pallas import tpu as pltpu

_EPS = 1e-5  # PyTorch BatchNorm2d default eps
_VMEM = pl.BlockSpec(memory_space=pltpu.MemorySpace.VMEM)


def _bn_cols(h, gamma, beta):
    """Training-mode BatchNorm over the lane (M) axis of (C, M).

    Two-pass (mean, then centered variance) per-channel batch statistics."""
    inv_m = 1.0 / h.shape[1]
    mu = jnp.sum(h, axis=1, keepdims=True) * inv_m
    d = h - mu
    var = jnp.sum(d * d, axis=1, keepdims=True) * inv_m
    return d * jax.lax.rsqrt(var + _EPS) * gamma + beta


def _make_fused_kernel(*, expand, use_res, N, H, W):
    """Whole inverted-residual block in one kernel body.

    Layout: channels-last-transposed flat (C, M) with M = N*H*W on the lane
    axis.  Depthwise 3x3 taps are lane rolls of h1; out-of-image taps are
    zeroed by factored {0,1} masks generated in-kernel from an iota."""
    M = N * H * W

    def _boundary_masks():
        # (1, M) f32 masks; ok*[1] is identically 1 and therefore omitted.
        m = jax.lax.broadcasted_iota(jnp.int32, (1, M), 1)
        w = m % W            # column within the row
        p = m % (H * W)      # flat index within the image (avoids a vector div)
        f32 = lambda b: b.astype(jnp.float32)
        okh = (f32(p >= W), None, f32(p < (H - 1) * W))       # ky = 0, 1, 2
        okw = (f32(w >= 1), None, f32(w <= W - 2))             # kx = 0, 1, 2
        return okh, okw

    def _depthwise(h1, wd):
        # 3x3, stride 1, pad 1 on (C, M).  tap(ky,kx)[c, m] = h1[c, m + s] with
        # s = (ky-1)*W + (kx-1); for in-image taps m+s stays in [0, M), so a
        # modular lane roll is exact and the wrapped rows are always masked.
        okh, okw = _boundary_masks()
        acc = None
        for ky in range(3):
            inner = None
            for kx in range(3):
                s = (ky - 1) * W + (kx - 1)
                tap = h1 if s == 0 else pltpu.roll(h1, shift=(-s) % M, axis=1)
                term = tap * wd[:, ky * 3 + kx:ky * 3 + kx + 1]
                if okw[kx] is not None:
                    term = term * okw[kx]
                inner = term if inner is None else inner + term
            if okh[ky] is not None:
                inner = inner * okh[ky]
            acc = inner if acc is None else acc + inner
        return acc

    def _tail(x, h1, wd, g2, b2, w3t, g3, b3, o_ref):
        # ---- stage 2: depthwise 3x3 + BN + ReLU6 --------------------------- #
        h2 = jnp.clip(_bn_cols(_depthwise(h1, wd), g2, b2), 0.0, 6.0)
        # ---- stage 3: 1x1 project (MXU, N = M lanes) + BN (+ residual) ----- #
        h3 = jnp.dot(w3t, h2, preferred_element_type=jnp.float32)
        h3 = _bn_cols(h3, g3, b3)
        if use_res:
            h3 = h3 + x
        o_ref[...] = h3

    if expand:
        def kernel(x_ref, w1t_ref, g1_ref, b1_ref, wd_ref, g2_ref, b2_ref,
                   w3t_ref, g3_ref, b3_ref, o_ref):
            x = x_ref[...]
            # ---- stage 1: 1x1 expand (MXU, N = M lanes) + BN + ReLU6 ------- #
            h1 = jnp.dot(w1t_ref[...], x, preferred_element_type=jnp.float32)
            h1 = jnp.clip(_bn_cols(h1, g1_ref[...], b1_ref[...]), 0.0, 6.0)
            _tail(x, h1, wd_ref[...], g2_ref[...], b2_ref[...],
                  w3t_ref[...], g3_ref[...], b3_ref[...], o_ref)
    else:
        def kernel(x_ref, wd_ref, g2_ref, b2_ref, w3t_ref, g3_ref, b3_ref,
                   o_ref):
            x = x_ref[...]
            _tail(x, x, wd_ref[...], g2_ref[...], b2_ref[...],
                  w3t_ref[...], g3_ref[...], b3_ref[...], o_ref)
    return kernel


# ------------------------------- wrapper ----------------------------------- #

def inverted_residual_block(x_nchw, params, *, expand_ratio, out_channel, stride):
    """Forward of Inverted_residual_block(in_channel, [expand_ratio, out_channel, stride])."""
    if stride != 1:
        # TODO(synk): stride=2 depthwise path (strided taps, no residual) not implemented.
        raise NotImplementedError("stride must be 1 for this kernel")
    N, Cin, H, W = x_nchw.shape
    hidden = int(Cin * expand_ratio)
    use_res = (stride == 1) and (Cin == out_channel)
    M = N * H * W
    expand = expand_ratio != 1

    # (C, M) layout: channels on sublanes, flattened pixels on lanes.
    x_cm = jnp.transpose(x_nchw, (1, 0, 2, 3)).reshape(Cin, M).astype(jnp.float32)

    args = [x_cm]
    if expand:
        args += [params["w1t"], params["g1"], params["b1"]]
    args += [params["wd"], params["g2"], params["b2"],
             params["w3t"], params["g3"], params["b3"]]

    flops = 2 * M * 9 * hidden + 2 * M * hidden * out_channel + 16 * M * hidden
    if expand:
        flops += 2 * M * Cin * hidden
    transcendentals = hidden * (2 if expand else 1) + out_channel
    bytes_accessed = 4 * (M * Cin + M * out_channel
                          + (hidden * Cin if expand else 0) + 9 * hidden
                          + hidden * out_channel
                          + (4 if expand else 2) * hidden + 2 * out_channel)

    out_cm = pl.pallas_call(
        _make_fused_kernel(expand=expand, use_res=use_res, N=N, H=H, W=W),
        out_shape=jax.ShapeDtypeStruct((out_channel, M), jnp.float32),
        in_specs=[_VMEM] * len(args),
        out_specs=_VMEM,
        compiler_params=pltpu.CompilerParams(vmem_limit_bytes=32 * 1024 * 1024),
        cost_estimate=pl.CostEstimate(flops=int(flops),
                                      transcendentals=int(transcendentals),
                                      bytes_accessed=int(bytes_accessed)),
    )(*args)

    # (Cout, M) -> NCHW
    return jnp.transpose(out_cm.reshape(out_channel, N, H, W), (1, 0, 2, 3))


# ------------------------- params / pure-JAX reference --------------------- #

def init_params(key, in_channel, expand_ratio, out_channel):
    """Params stored in the kernel-native (C, M) layout (weights pre-transposed)."""
    hidden = int(in_channel * expand_ratio)
    ks = jax.random.split(key, 9)
    return {
        "w1t": 0.1 * jax.random.normal(ks[0], (hidden, in_channel), jnp.float32),
        "g1": 1.0 + 0.1 * jax.random.normal(ks[1], (hidden, 1), jnp.float32),
        "b1": 0.1 * jax.random.normal(ks[2], (hidden, 1), jnp.float32),
        "wd": 0.1 * jax.random.normal(ks[3], (hidden, 9), jnp.float32),
        "g2": 1.0 + 0.1 * jax.random.normal(ks[4], (hidden, 1), jnp.float32),
        "b2": 0.1 * jax.random.normal(ks[5], (hidden, 1), jnp.float32),
        "w3t": 0.1 * jax.random.normal(ks[6], (out_channel, hidden), jnp.float32),
        "g3": 1.0 + 0.1 * jax.random.normal(ks[7], (out_channel, 1), jnp.float32),
        "b3": 0.1 * jax.random.normal(ks[8], (out_channel, 1), jnp.float32),
    }


def reference_forward(x_nchw, p, *, expand_ratio, out_channel, stride):
    x = jnp.transpose(x_nchw, (0, 2, 3, 1)).astype(jnp.float32)
    N, H, W, Cin = x.shape
    hidden = int(Cin * expand_ratio)
    use_res = (stride == 1) and (Cin == out_channel)
    dn = ("NHWC", "HWIO", "NHWC")

    def bn(h, g, b):
        mu = jnp.mean(h, axis=(0, 1, 2), keepdims=True)
        var = jnp.mean((h - mu) ** 2, axis=(0, 1, 2), keepdims=True)
        return ((h - mu) * jax.lax.rsqrt(var + _EPS)
                * g.reshape(1, 1, 1, -1) + b.reshape(1, 1, 1, -1))

    h = x
    if expand_ratio != 1:
        w1 = p["w1t"].T  # (Cin, hidden)
        h = jax.lax.conv_general_dilated(h, w1[None, None], (1, 1), "VALID",
                                         dimension_numbers=dn)
        h = jnp.clip(bn(h, p["g1"], p["b1"]), 0.0, 6.0)
    wd = p["wd"].T.reshape(3, 3, 1, hidden)  # (ky, kx, 1, C)
    h = jax.lax.conv_general_dilated(h, wd, (stride, stride), ((1, 1), (1, 1)),
                                     dimension_numbers=dn, feature_group_count=hidden)
    h = jnp.clip(bn(h, p["g2"], p["b2"]), 0.0, 6.0)
    w3 = p["w3t"].T  # (hidden, out)
    h = jax.lax.conv_general_dilated(h, w3[None, None], (1, 1), "VALID",
                                     dimension_numbers=dn)
    h = bn(h, p["g3"], p["b3"])
    if use_res:
        h = h + x
    return jnp.transpose(h, (0, 3, 1, 2))


if __name__ == "__main__":
    key = jax.random.PRNGKey(0)
    N, H, W = 2, 16, 16
    # Config A: Inverted_residual_block(8, [6, 8, 1]) -> hidden=48, residual path.
    # Config B: Inverted_residual_block(8, [1, 8, 1]) -> expand_ratio==1 branch.
    for (in_channel, expand_ratio, out_channel, stride) in [(8, 6, 8, 1), (8, 1, 8, 1)]:
        key, kx, kp = jax.random.split(key, 3)
        x = jax.random.normal(kx, (N, in_channel, H, W), jnp.float32)
        params = init_params(kp, in_channel, expand_ratio, out_channel)

        fwd = jax.jit(functools.partial(inverted_residual_block,
                                        expand_ratio=expand_ratio,
                                        out_channel=out_channel,
                                        stride=stride))
        out = fwd(x, params)
        jax.block_until_ready(out)

        ref = reference_forward(x, params, expand_ratio=expand_ratio,
                                out_channel=out_channel, stride=stride)
        assert out.shape == (N, out_channel, H, W), out.shape
        max_err = float(jnp.max(jnp.abs(out - ref)))
        assert jnp.allclose(out, ref, atol=2e-3, rtol=2e-3), f"max_err={max_err}"

    print("KERNEL_OK")
</pallas_src>

<mosaic_0001>
module attributes {stable_mosaic.version = 11 : i64} {
  func.func @kernel(%arg0: memref<8x512xf32, #tpu.memory_space<vmem>>, %arg1: memref<48x8xf32, #tpu.memory_space<vmem>>, %arg2: memref<48x1xf32, #tpu.memory_space<vmem>>, %arg3: memref<48x1xf32, #tpu.memory_space<vmem>>, %arg4: memref<48x9xf32, #tpu.memory_space<vmem>>, %arg5: memref<48x1xf32, #tpu.memory_space<vmem>>, %arg6: memref<48x1xf32, #tpu.memory_space<vmem>>, %arg7: memref<8x48xf32, #tpu.memory_space<vmem>>, %arg8: memref<8x1xf32, #tpu.memory_space<vmem>>, %arg9: memref<8x1xf32, #tpu.memory_space<vmem>>, %arg10: memref<8x512xf32, #tpu.memory_space<vmem>>) attributes {dimension_semantics = [], scalar_prefetch = 0 : i64, scratch_operands = 0 : i64, tpu.core_type = #tpu.core_type<tc>} {
    %c0 = arith.constant 0 : index
    %c0_0 = arith.constant 0 : index
    %0 = vector.load %arg0[%c0, %c0_0] : memref<8x512xf32, #tpu.memory_space<vmem>>, vector<8x512xf32>
    %c0_1 = arith.constant 0 : index
    %c0_2 = arith.constant 0 : index
    %1 = vector.load %arg1[%c0_1, %c0_2] : memref<48x8xf32, #tpu.memory_space<vmem>>, vector<48x8xf32>
    %cst = arith.constant dense<0.000000e+00> : vector<48x512xf32>
    %2 = tpu.matmul %1, %0, %cst {dimension_numbers = #tpu.dot_dimension_numbers<[1], [0], [0], [1], [0, 0, 1, 1], [], []>} : vector<48x8xf32>, vector<8x512xf32>, vector<48x512xf32> -> vector<48x512xf32>
    %c0_3 = arith.constant 0 : index
    %c0_4 = arith.constant 0 : index
    %3 = vector.load %arg2[%c0_3, %c0_4] : memref<48x1xf32, #tpu.memory_space<vmem>>, vector<48x1xf32>
    %c0_5 = arith.constant 0 : index
    %c0_6 = arith.constant 0 : index
    %4 = vector.load %arg3[%c0_5, %c0_6] : memref<48x1xf32, #tpu.memory_space<vmem>>, vector<48x1xf32>
    %cst_7 = arith.constant dense<0.000000e+00> : vector<48xf32>
    %5 = vector.multi_reduction <add>, %2, %cst_7 [1] : vector<48x512xf32> to vector<48xf32>
    %6 = vector.shape_cast %5 : vector<48xf32> to vector<48x1xf32>
    %cst_8 = arith.constant 0.001953125 : f32
    %7 = vector.broadcast %cst_8 : f32 to vector<48x1xf32>
    %8 = arith.mulf %6, %7 : vector<48x1xf32>
    %9 = vector.broadcast %8 : vector<48x1xf32> to vector<48x512xf32>
    %10 = arith.subf %2, %9 : vector<48x512xf32>
    %11 = arith.mulf %10, %10 : vector<48x512xf32>
    %cst_9 = arith.constant dense<0.000000e+00> : vector<48xf32>
    %12 = vector.multi_reduction <add>, %11, %cst_9 [1] : vector<48x512xf32> to vector<48xf32>
    %13 = vector.shape_cast %12 : vector<48xf32> to vector<48x1xf32>
    %cst_10 = arith.constant 0.001953125 : f32
    %14 = vector.broadcast %cst_10 : f32 to vector<48x1xf32>
    %15 = arith.mulf %13, %14 : vector<48x1xf32>
    %cst_11 = arith.constant 9.99999974E-6 : f32
    %16 = vector.broadcast %cst_11 : f32 to vector<48x1xf32>
    %17 = arith.addf %15, %16 : vector<48x1xf32>
    %18 = math.rsqrt %17 : vector<48x1xf32>
    %19 = vector.broadcast %18 : vector<48x1xf32> to vector<48x512xf32>
    %20 = arith.mulf %10, %19 : vector<48x512xf32>
    %21 = vector.broadcast %3 : vector<48x1xf32> to vector<48x512xf32>
    %22 = arith.mulf %20, %21 : vector<48x512xf32>
    %23 = vector.broadcast %4 : vector<48x1xf32> to vector<48x512xf32>
    %24 = arith.addf %22, %23 : vector<48x512xf32>
    %cst_12 = arith.constant 0.000000e+00 : f32
    %cst_13 = arith.constant 6.000000e+00 : f32
    %25 = vector.broadcast %cst_12 : f32 to vector<48x512xf32>
    %26 = arith.maximumf %25, %24 : vector<48x512xf32>
    %27 = vector.broadcast %cst_13 : f32 to vector<48x512xf32>
    %28 = arith.minimumf %27, %26 : vector<48x512xf32>
    %c0_14 = arith.constant 0 : index
    %c0_15 = arith.constant 0 : index
    %29 = vector.load %arg4[%c0_14, %c0_15] : memref<48x9xf32, #tpu.memory_space<vmem>>, vector<48x9xf32>
    %c0_16 = arith.constant 0 : index
    %c0_17 = arith.constant 0 : index
    %30 = vector.load %arg5[%c0_16, %c0_17] : memref<48x1xf32, #tpu.memory_space<vmem>>, vector<48x1xf32>
    %c0_18 = arith.constant 0 : index
    %c0_19 = arith.constant 0 : index
    %31 = vector.load %arg6[%c0_18, %c0_19] : memref<48x1xf32, #tpu.memory_space<vmem>>, vector<48x1xf32>
    %c0_20 = arith.constant 0 : index
    %c0_21 = arith.constant 0 : index
    %32 = vector.load %arg7[%c0_20, %c0_21] : memref<8x48xf32, #tpu.memory_space<vmem>>, vector<8x48xf32>
    %c0_22 = arith.constant 0 : index
    %c0_23 = arith.constant 0 : index
    %33 = vector.load %arg8[%c0_22, %c0_23] : memref<8x1xf32, #tpu.memory_space<vmem>>, vector<8x1xf32>
    %c0_24 = arith.constant 0 : index
    %c0_25 = arith.constant 0 : index
    %34 = vector.load %arg9[%c0_24, %c0_25] : memref<8x1xf32, #tpu.memory_space<vmem>>, vector<8x1xf32>
    %35 = tpu.iota {dimensions = array<i32: 1>} : vector<1x512xi32>
    %c16_i32 = arith.constant 16 : i32
    %c0_i32 = arith.constant 0 : i32
    %36 = arith.cmpi eq, %c16_i32, %c0_i32 : i32
    %c1_i32 = arith.constant 1 : i32
    %37 = arith.select %36, %c1_i32, %c16_i32 : i32
    %38 = vector.broadcast %37 : i32 to vector<1x512xi32>
    %39 = arith.remsi %35, %38 : vector<1x512xi32>
    %c0_i32_26 = arith.constant 0 : i32
    %40 = vector.broadcast %c0_i32_26 : i32 to vector<1x512xi32>
    %41 = arith.cmpi ne, %39, %40 : vector<1x512xi32>
    %c0_i32_27 = arith.constant 0 : i32
    %42 = vector.broadcast %c0_i32_27 : i32 to vector<1x512xi32>
    %43 = arith.cmpi slt, %39, %42 : vector<1x512xi32>
    %c0_i32_28 = arith.constant 0 : i32
    %44 = arith.cmpi slt, %37, %c0_i32_28 : i32
    %45 = vector.broadcast %44 : i1 to vector<1x512xi1>
    %46 = vector.broadcast %45 : vector<1x512xi1> to vector<1x512xi1>
    %47 = arith.xori %43, %46 : vector<1x512xi1>
    %48 = arith.andi %47, %41 : vector<1x512xi1>
    %49 = vector.broadcast %37 : i32 to vector<1x512xi32>
    %50 = arith.addi %39, %49 : vector<1x512xi32>
    %51 = arith.select %48, %50, %39 : vector<1x512xi1>, vector<1x512xi32>
    %c256_i32 = arith.constant 256 : i32
    %c0_i32_29 = arith.constant 0 : i32
    %52 = arith.cmpi eq, %c256_i32, %c0_i32_29 : i32
    %c1_i32_30 = arith.constant 1 : i32
    %53 = arith.select %52, %c1_i32_30, %c256_i32 : i32
    %54 = vector.broadcast %53 : i32 to vector<1x512xi32>
    %55 = arith.remsi %35, %54 : vector<1x512xi32>
    %c0_i32_31 = arith.constant 0 : i32
    %56 = vector.broadcast %c0_i32_31 : i32 to vector<1x512xi32>
    %57 = arith.cmpi ne, %55, %56 : vector<1x512xi32>
    %c0_i32_32 = arith.constant 0 : i32
    %58 = vector.broadcast %c0_i32_32 : i32 to vector<1x512xi32>
    %59 = arith.cmpi slt, %55, %58 : vector<1x512xi32>
    %c0_i32_33 = arith.constant 0 : i32
    %60 = arith.cmpi slt, %53, %c0_i32_33 : i32
    %61 = vector.broadcast %60 : i1 to vector<1x512xi1>
    %62 = vector.broadcast %61 : vector<1x512xi1> to vector<1x512xi1>
    %63 = arith.xori %59, %62 : vector<1x512xi1>
    %64 = arith.andi %63, %57 : vector<1x512xi1>
    %65 = vector.broadcast %53 : i32 to vector<1x512xi32>
    %66 = arith.addi %55, %65 : vector<1x512xi32>
    %67 = arith.select %64, %66, %55 : vector<1x512xi1>, vector<1x512xi32>
    %c16_i32_34 = arith.constant 16 : i32
    %68 = vector.broadcast %c16_i32_34 : i32 to vector<1x512xi32>
    %69 = arith.cmpi sge, %67, %68 : vector<1x512xi32>
    %70 = arith.extui %69 : vector<1x512xi1> to vector<1x512xi32>
    %71 = arith.sitofp %70 : vector<1x512xi32> to vector<1x512xf32>
    %c240_i32 = arith.constant 240 : i32
    %72 = vector.broadcast %c240_i32 : i32 to vector<1x512xi32>
    %73 = arith.cmpi slt, %67, %72 : vector<1x512xi32>
    %74 = arith.extui %73 : vector<1x512xi1> to vector<1x512xi32>
    %75 = arith.sitofp %74 : vector<1x512xi32> to vector<1x512xf32>
    %c1_i32_35 = arith.constant 1 : i32
    %76 = vector.broadcast %c1_i32_35 : i32 to vector<1x512xi32>
    %77 = arith.cmpi sge, %51, %76 : vector<1x512xi32>
    %78 = arith.extui %77 : vector<1x512xi1> to vector<1x512xi32>
    %79 = arith.sitofp %78 : vector<1x512xi32> to vector<1x512xf32>
    %c14_i32 = arith.constant 14 : i32
    %80 = vector.broadcast %c14_i32 : i32 to vector<1x512xi32>
    %81 = arith.cmpi sle, %51, %80 : vector<1x512xi32>
    %82 = arith.extui %81 : vector<1x512xi1> to vector<1x512xi32>
    %83 = arith.sitofp %82 : vector<1x512xi32> to vector<1x512xf32>
    %c17_i32 = arith.constant 17 : i32
    %84 = tpu.dynamic_rotate %28 by %c17_i32 dim 1 : vector<48x512xf32>, i32 -> vector<48x512xf32>
    %85 = vector.extract_strided_slice %29 {offsets = [0, 0], sizes = [48, 1], strides = [1, 1]} : vector<48x9xf32> to vector<48x1xf32>
    %86 = vector.broadcast %85 : vector<48x1xf32> to vector<48x512xf32>
    %87 = arith.mulf %84, %86 : vector<48x512xf32>
    %88 = vector.broadcast %79 : vector<1x512xf32> to vector<48x512xf32>
    %89 = arith.mulf %87, %88 : vector<48x512xf32>
    %c16_i32_36 = arith.constant 16 : i32
    %90 = tpu.dynamic_rotate %28 by %c16_i32_36 dim 1 : vector<48x512xf32>, i32 -> vector<48x512xf32>
    %91 = vector.extract_strided_slice %29 {offsets = [0, 1], sizes = [48, 1], strides = [1, 1]} : vector<48x9xf32> to vector<48x1xf32>
    %92 = vector.broadcast %91 : vector<48x1xf32> to vector<48x512xf32>
    %93 = arith.mulf %90, %92 : vector<48x512xf32>
    %94 = arith.addf %89, %93 : vector<48x512xf32>
    %c15_i32 = arith.constant 15 : i32
    %95 = tpu.dynamic_rotate %28 by %c15_i32 dim 1 : vector<48x512xf32>, i32 -> vector<48x512xf32>
    %96 = vector.extract_strided_slice %29 {offsets = [0, 2], sizes = [48, 1], strides = [1, 1]} : vector<48x9xf32> to vector<48x1xf32>
    %97 = vector.broadcast %96 : vector<48x1xf32> to vector<48x512xf32>
    %98 = arith.mulf %95, %97 : vector<48x512xf32>
    %99 = vector.broadcast %83 : vector<1x512xf32> to vector<48x512xf32>
    %100 = arith.mulf %98, %99 : vector<48x512xf32>
    %101 = arith.addf %94, %100 : vector<48x512xf32>
    %102 = vector.broadcast %71 : vector<1x512xf32> to vector<48x512xf32>
    %103 = arith.mulf %101, %102 : vector<48x512xf32>
    %c1_i32_37 = arith.constant 1 : i32
    %104 = tpu.dynamic_rotate %28 by %c1_i32_37 dim 1 : vector<48x512xf32>, i32 -> vector<48x512xf32>
    %105 = vector.extract_strided_slice %29 {offsets = [0, 3], sizes = [48, 1], strides = [1, 1]} : vector<48x9xf32> to vector<48x1xf32>
    %106 = vector.broadcast %105 : vector<48x1xf32> to vector<48x512xf32>
    %107 = arith.mulf %104, %106 : vector<48x512xf32>
    %108 = vector.broadcast %79 : vector<1x512xf32> to vector<48x512xf32>
    %109 = arith.mulf %107, %108 : vector<48x512xf32>
    %110 = vector.extract_strided_slice %29 {offsets = [0, 4], sizes = [48, 1], strides = [1, 1]} : vector<48x9xf32> to vector<48x1xf32>
    %111 = vector.broadcast %110 : vector<48x1xf32> to vector<48x512xf32>
    %112 = arith.mulf %28, %111 : vector<48x512xf32>
    %113 = arith.addf %109, %112 : vector<48x512xf32>
    %c511_i32 = arith.constant 511 : i32
    %114 = tpu.dynamic_rotate %28 by %c511_i32 dim 1 : vector<48x512xf32>, i32 -> vector<48x512xf32>
    %115 = vector.extract_strided_slice %29 {offsets = [0, 5], sizes = [48, 1], strides = [1, 1]} : vector<48x9xf32> to vector<48x1xf32>
    %116 = vector.broadcast %115 : vector<48x1xf32> to vector<48x512xf32>
    %117 = arith.mulf %114, %116 : vector<48x512xf32>
    %118 = vector.broadcast %83 : vector<1x512xf32> to vector<48x512xf32>
    %119 = arith.mulf %117, %118 : vector<48x512xf32>
    %120 = arith.addf %113, %119 : vector<48x512xf32>
    %121 = arith.addf %103, %120 : vector<48x512xf32>
    %c497_i32 = arith.constant 497 : i32
    %122 = tpu.dynamic_rotate %28 by %c497_i32 dim 1 : vector<48x512xf32>, i32 -> vector<48x512xf32>
    %123 = vector.extract_strided_slice %29 {offsets = [0, 6], sizes = [48, 1], strides = [1, 1]} : vector<48x9xf32> to vector<48x1xf32>
    %124 = vector.broadcast %123 : vector<48x1xf32> to vector<48x512xf32>
    %125 = arith.mulf %122, %124 : vector<48x512xf32>
    %126 = vector.broadcast %79 : vector<1x512xf32> to vector<48x512xf32>
    %127 = arith.mulf %125, %126 : vector<48x512xf32>
    %c496_i32 = arith.constant 496 : i32
    %128 = tpu.dynamic_rotate %28 by %c496_i32 dim 1 : vector<48x512xf32>, i32 -> vector<48x512xf32>
    %129 = vector.extract_strided_slice %29 {offsets = [0, 7], sizes = [48, 1], strides = [1, 1]} : vector<48x9xf32> to vector<48x1xf32>
    %130 = vector.broadcast %129 : vector<48x1xf32> to vector<48x512xf32>
    %131 = arith.mulf %128, %130 : vector<48x512xf32>
    %132 = arith.addf %127, %131 : vector<48x512xf32>
    %c495_i32 = arith.constant 495 : i32
    %133 = tpu.dynamic_rotate %28 by %c495_i32 dim 1 : vector<48x512xf32>, i32 -> vector<48x512xf32>
    %134 = vector.extract_strided_slice %29 {offsets = [0, 8], sizes = [48, 1], strides = [1, 1]} : vector<48x9xf32> to vector<48x1xf32>
    %135 = vector.broadcast %134 : vector<48x1xf32> to vector<48x512xf32>
    %136 = arith.mulf %133, %135 : vector<48x512xf32>
    %137 = vector.broadcast %83 : vector<1x512xf32> to vector<48x512xf32>
    %138 = arith.mulf %136, %137 : vector<48x512xf32>
    %139 = arith.addf %132, %138 : vector<48x512xf32>
    %140 = vector.broadcast %75 : vector<1x512xf32> to vector<48x512xf32>
    %141 = arith.mulf %139, %140 : vector<48x512xf32>
    %142 = arith.addf %121, %141 : vector<48x512xf32>
    %cst_38 = arith.constant dense<0.000000e+00> : vector<48xf32>
    %143 = vector.multi_reduction <add>, %142, %cst_38 [1] : vector<48x512xf32> to vector<48xf32>
    %144 = vector.shape_cast %143 : vector<48xf32> to vector<48x1xf32>
    %cst_39 = arith.constant 0.001953125 : f32
    %145 = vector.broadcast %cst_39 : f32 to vector<48x1xf32>
    %146 = arith.mulf %144, %145 : vector<48x1xf32>
    %147 = vector.broadcast %146 : vector<48x1xf32> to vector<48x512xf32>
    %148 = arith.subf %142, %147 : vector<48x512xf32>
    %149 = arith.mulf %148, %148 : vector<48x512xf32>
    %cst_40 = arith.constant dense<0.000000e+00> : vector<48xf32>
    %150 = vector.multi_reduction <add>, %149, %cst_40 [1] : vector<48x512xf32> to vector<48xf32>
    %151 = vector.shape_cast %150 : vector<48xf32> to vector<48x1xf32>
    %cst_41 = arith.constant 0.001953125 : f32
    %152 = vector.broadcast %cst_41 : f32 to vector<48x1xf32>
    %153 = arith.mulf %151, %152 : vector<48x1xf32>
    %cst_42 = arith.constant 9.99999974E-6 : f32
    %154 = vector.broadcast %cst_42 : f32 to vector<48x1xf32>
    %155 = arith.addf %153, %154 : vector<48x1xf32>
    %156 = math.rsqrt %155 : vector<48x1xf32>
    %157 = vector.broadcast %156 : vector<48x1xf32> to vector<48x512xf32>
    %158 = arith.mulf %148, %157 : vector<48x512xf32>
    %159 = vector.broadcast %30 : vector<48x1xf32> to vector<48x512xf32>
    %160 = arith.mulf %158, %159 : vector<48x512xf32>
    %161 = vector.broadcast %31 : vector<48x1xf32> to vector<48x512xf32>
    %162 = arith.addf %160, %161 : vector<48x512xf32>
    %cst_43 = arith.constant 0.000000e+00 : f32
    %cst_44 = arith.constant 6.000000e+00 : f32
    %163 = vector.broadcast %cst_43 : f32 to vector<48x512xf32>
    %164 = arith.maximumf %163, %162 : vector<48x512xf32>
    %165 = vector.broadcast %cst_44 : f32 to vector<48x512xf32>
    %166 = arith.minimumf %165, %164 : vector<48x512xf32>
    %cst_45 = arith.constant dense<0.000000e+00> : vector<8x512xf32>
    %167 = tpu.matmul %32, %166, %cst_45 {dimension_numbers = #tpu.dot_dimension_numbers<[1], [0], [0], [1], [0, 0, 1, 1], [], []>} : vector<8x48xf32>, vector<48x512xf32>, vector<8x512xf32> -> vector<8x512xf32>
    %cst_46 = arith.constant dense<0.000000e+00> : vector<8xf32>
    %168 = vector.multi_reduction <add>, %167, %cst_46 [1] : vector<8x512xf32> to vector<8xf32>
    %169 = vector.shape_cast %168 : vector<8xf32> to vector<8x1xf32>
    %cst_47 = arith.constant 0.001953125 : f32
    %170 = vector.broadcast %cst_47 : f32 to vector<8x1xf32>
    %171 = arith.mulf %169, %170 : vector<8x1xf32>
    %172 = vector.broadcast %171 : vector<8x1xf32> to vector<8x512xf32>
    %173 = arith.subf %167, %172 : vector<8x512xf32>
    %174 = arith.mulf %173, %173 : vector<8x512xf32>
    %cst_48 = arith.constant dense<0.000000e+00> : vector<8xf32>
    %175 = vector.multi_reduction <add>, %174, %cst_48 [1] : vector<8x512xf32> to vector<8xf32>
    %176 = vector.shape_cast %175 : vector<8xf32> to vector<8x1xf32>
    %cst_49 = arith.constant 0.001953125 : f32
    %177 = vector.broadcast %cst_49 : f32 to vector<8x1xf32>
    %178 = arith.mulf %176, %177 : vector<8x1xf32>
    %cst_50 = arith.constant 9.99999974E-6 : f32
    %179 = vector.broadcast %cst_50 : f32 to vector<8x1xf32>
    %180 = arith.addf %178, %179 : vector<8x1xf32>
    %181 = math.rsqrt %180 : vector<8x1xf32>
    %182 = vector.broadcast %181 : vector<8x1xf32> to vector<8x512xf32>
    %183 = arith.mulf %173, %182 : vector<8x512xf32>
    %184 = vector.broadcast %33 : vector<8x1xf32> to vector<8x512xf32>
    %185 = arith.mulf %183, %184 : vector<8x512xf32>
    %186 = vector.broadcast %34 : vector<8x1xf32> to vector<8x512xf32>
    %187 = arith.addf %185, %186 : vector<8x512xf32>
    %188 = arith.addf %187, %0 : vector<8x512xf32>
    %c0_51 = arith.constant 0 : index
    %c0_52 = arith.constant 0 : index
    %189 = vector.load %arg10[%c0_51, %c0_52] : memref<8x512xf32, #tpu.memory_space<vmem>>, vector<8x512xf32>
    tpu.vector_store %arg10[%c0_51, %c0_52], %188 {strides = array<i32>} : memref<8x512xf32, #tpu.memory_space<vmem>>, vector<8x512xf32>,
    return
  }
}

</mosaic_0001>

<llo_original>
// kernel: inverted_residual_block.1
$region0: #{inverted_residual_block.1}
  #allocation0 [shape = 'u32[]', space=smem, size = 0x4, offset = 0x4, fixed_abs, tag = 'smem constant byte address 0x4 - core index']
  #allocation1 [shape = 'u32[72,128]{1,0:T(1,128)}', space=vmem, size = 0x9000, scoped, tag = 'internal scratch']
  %s0 = inlined_call_operand.vmem [shape: f32[8,512], index: 0, kind: input, shape index: {}]
  %s1 = inlined_call_operand.vmem [shape: f32[48,8], index: 1, kind: input, shape index: {}]
  %s2 = inlined_call_operand.vmem [shape: f32[48,1], index: 2, kind: input, shape index: {}]
  %s3 = inlined_call_operand.vmem [shape: f32[48,1], index: 3, kind: input, shape index: {}]
  %s4 = inlined_call_operand.vmem [shape: f32[48,9], index: 4, kind: input, shape index: {}]
  %s5 = inlined_call_operand.vmem [shape: f32[48,1], index: 5, kind: input, shape index: {}]
  %s6 = inlined_call_operand.vmem [shape: f32[48,1], index: 6, kind: input, shape index: {}]
  %s7 = inlined_call_operand.vmem [shape: f32[8,48], index: 7, kind: input, shape index: {}]
  %s8 = inlined_call_operand.vmem [shape: f32[8,1], index: 8, kind: input, shape index: {}]
  %s9 = inlined_call_operand.vmem [shape: f32[8,1], index: 9, kind: input, shape index: {}]
  %s10 = inlined_call_operand.vmem [shape: f32[8,512], index: 10, kind: output, shape index: {}]
  %s11 = sld [smem:[#allocation0]]
  $region50: #{inverted_residual_block.1} parent=0
    _
  %s13 = ssub.s32 1, %s11
  %s14 = scalar_select 0, %s13, %s11
  // Predicated region
  $region2: #{inverted_residual_block.1} parent=0 // pred_check
    _
  $region3: #{inverted_residual_block.1} parent=0 // pred_check_branch
    %16 = sbr.rel (0) target = $region5
  $region4: #{inverted_residual_block.1} parent=0 // pred_region
    _
  $region5: #{inverted_residual_block.1} parent=0 // pred_fallthru
    _
  // Predicated region
  $region6: #{inverted_residual_block.1} parent=0 // pred_check
    _
  $region7: #{inverted_residual_block.1} parent=0 // pred_check_branch
    %18 = sbr.rel (0) target = $region9
  $region8: #{inverted_residual_block.1} parent=0 // pred_region
    _
  $region9: #{inverted_residual_block.1} parent=0 // pred_fallthru
    _
  // Predicated region
  $region10: #{inverted_residual_block.1} parent=0 // pred_check
    _
  $region11: #{inverted_residual_block.1} parent=0 // pred_check_branch
    %20 = sbr.rel (0) target = $region13
  $region12: #{inverted_residual_block.1} parent=0 // pred_region
    _
  $region13: #{inverted_residual_block.1} parent=0 // pred_fallthru
    _
  // Predicated region
  $region14: #{inverted_residual_block.1} parent=0 // pred_check
    _
  $region15: #{inverted_residual_block.1} parent=0 // pred_check_branch
    %22 = sbr.rel (0) target = $region17
  $region16: #{inverted_residual_block.1} parent=0 // pred_region
    _
  $region17: #{inverted_residual_block.1} parent=0 // pred_fallthru
    _
  // Predicated region
  $region18: #{inverted_residual_block.1} parent=0 // pred_check
    _
  $region19: #{inverted_residual_block.1} parent=0 // pred_check_branch
    %24 = sbr.rel (0) target = $region21
  $region20: #{inverted_residual_block.1} parent=0 // pred_region
    _
  $region21: #{inverted_residual_block.1} parent=0 // pred_fallthru
    _
  // Predicated region
  $region22: #{inverted_residual_block.1} parent=0 // pred_check
    _
  $region23: #{inverted_residual_block.1} parent=0 // pred_check_branch
    %26 = sbr.rel (0) target = $region25
  $region24: #{inverted_residual_block.1} parent=0 // pred_region
    _
  $region25: #{inverted_residual_block.1} parent=0 // pred_fallthru
    _
  // Predicated region
  $region26: #{inverted_residual_block.1} parent=0 // pred_check
    _
  $region27: #{inverted_residual_block.1} parent=0 // pred_check_branch
    %28 = sbr.rel (0) target = $region29
  $region28: #{inverted_residual_block.1} parent=0 // pred_region
    _
  $region29: #{inverted_residual_block.1} parent=0 // pred_fallthru
    _
  // Predicated region
  $region30: #{inverted_residual_block.1} parent=0 // pred_check
    _
  $region31: #{inverted_residual_block.1} parent=0 // pred_check_branch
    %30 = sbr.rel (0) target = $region33
  $region32: #{inverted_residual_block.1} parent=0 // pred_region
    _
  $region33: #{inverted_residual_block.1} parent=0 // pred_fallthru
    _
  // Predicated region
  $region34: #{inverted_residual_block.1} parent=0 // pred_check
    _
  $region35: #{inverted_residual_block.1} parent=0 // pred_check_branch
    %32 = sbr.rel (0) target = $region37
  $region36: #{inverted_residual_block.1} parent=0 // pred_region
    _
  $region37: #{inverted_residual_block.1} parent=0 // pred_fallthru
    _
  // Predicated region
  $region38: #{inverted_residual_block.1} parent=0 // pred_check
    _
  $region39: #{inverted_residual_block.1} parent=0 // pred_check_branch
    %34 = sbr.rel (0) target = $region41
  $region40: #{inverted_residual_block.1} parent=0 // pred_region
    _
  $region41: #{inverted_residual_block.1} parent=0 // pred_fallthru
    _
  %v35 = vld [vmem:[%s0] sm:$0xff]
  %v36 = vld [vmem:[%s0 + $0x8] sm:$0xff]
  %v37 = vld [vmem:[%s0 + $0x10] sm:$0xff]
  %v38 = vld [vmem:[%s0 + $0x18] sm:$0xff]
  %v39 = vld [vmem:[%s1] sm:$0xff]
  %v40 = vld [vmem:[%s1 + $0x8] sm:$0xff]
  %v41 = vld [vmem:[%s1 + $0x10] sm:$0xff]
  %v42 = vld [vmem:[%s1 + $0x18] sm:$0xff]
  %v43 = vld [vmem:[%s1 + $0x20] sm:$0xff]
  %v44 = vld [vmem:[%s1 + $0x28] sm:$0xff]
  %vm45 = vcmask 64512
  %v47 = vsel %vm45, %v39, 0
  %v50 = vsel %vm45, %v40, 0
  %v53 = vsel %vm45, %v41, 0
  %v56 = vsel %vm45, %v42, 0
  %v59 = vsel %vm45, %v43, 0
  %v62 = vsel %vm45, %v44, 0
  %64 = vmatpush.msra.mxu0 0.0
  %65 = vmatpush.msra.mxu0 0.0
  %66 = vmatpush.msra.mxu0 0.0
  %67 = vmatpush.msra.mxu0 0.0
  %68 = vmatpush.msra.mxu0 0.0
  %69 = vmatpush.msra.mxu0 0.0
  %70 = vmatpush.msra.mxu0 0.0
  %71 = vmatpush.msra.mxu0 0.0
  %72 = vmatpush.msra.mxu0 0.0
  %73 = vmatpush.msra.mxu0 0.0
  %74 = vmatpush.msra.mxu0 0.0
  %75 = vmatpush.msra.mxu0 0.0
  %76 = vmatpush.msra.mxu0 0.0
  %77 = vmatpush.msra.mxu0 0.0
  %78 = vmatpush.msra.mxu0 0.0
  %79 = vmatpush.msra.mxu0 %v35
  %80 = vmatmul.f32.gmra.mxu0 %v47
  %v81 = vpop.f32.mrf.mxu0
  %v82 = vadd.f32 0.0, %v81
  %83 = vmatmul.f32.gmra.mxu0 %v50
  %v84 = vpop.f32.mrf.mxu0
  %v85 = vadd.f32 0.0, %v84
  %86 = vmatmul.f32.gmra.mxu0 %v53
  %v87 = vpop.f32.mrf.mxu0
  %v88 = vadd.f32 0.0, %v87
  %89 = vmatmul.f32.gmra.mxu0 %v56
  %v90 = vpop.f32.mrf.mxu0
  %v91 = vadd.f32 0.0, %v90
  %92 = vmatmul.f32.gmra.mxu0 %v59
  %v93 = vpop.f32.mrf.mxu0
  %v94 = vadd.f32 0.0, %v93
  %95 = vmatmul.f32.gmra.mxu0 %v62
  %v96 = vpop.f32.mrf.mxu0
  %v97 = vadd.f32 0.0, %v96
  %98 = vdwg.mxu0
  %99 = vmatpush.msra.mxu0 0.0
  %100 = vmatpush.msra.mxu0 0.0
  %101 = vmatpush.msra.mxu0 0.0
  %102 = vmatpush.msra.mxu0 0.0
  %103 = vmatpush.msra.mxu0 0.0
  %104 = vmatpush.msra.mxu0 0.0
  %105 = vmatpush.msra.mxu0 0.0
  %106 = vmatpush.msra.mxu0 0.0
  %107 = vmatpush.msra.mxu0 0.0
  %108 = vmatpush.msra.mxu0 0.0
  %109 = vmatpush.msra.mxu0 0.0
  %110 = vmatpush.msra.mxu0 0.0
  %111 = vmatpush.msra.mxu0 0.0
  %112 = vmatpush.msra.mxu0 0.0
  %113 = vmatpush.msra.mxu0 0.0
  %114 = vmatpush.msra.mxu0 %v36
  %115 = vmatmul.f32.gmra.mxu0 %v47
  %v116 = vpop.f32.mrf.mxu0
  %v117 = vadd.f32 0.0, %v116
  %118 = vmatmul.f32.gmra.mxu0 %v50
  %v119 = vpop.f32.mrf.mxu0
  %v120 = vadd.f32 0.0, %v119
  %121 = vmatmul.f32.gmra.mxu0 %v53
  %v122 = vpop.f32.mrf.mxu0
  %v123 = vadd.f32 0.0, %v122
  %124 = vmatmul.f32.gmra.mxu0 %v56
  %v125 = vpop.f32.mrf.mxu0
  %v126 = vadd.f32 0.0, %v125
  %127 = vmatmul.f32.gmra.mxu0 %v59
  %v128 = vpop.f32.mrf.mxu0
  %v129 = vadd.f32 0.0, %v128
  %130 = vmatmul.f32.gmra.mxu0 %v62
  %v131 = vpop.f32.mrf.mxu0
  %v132 = vadd.f32 0.0, %v131
  %133 = vdwg.mxu0
  %134 = vmatpush.msra.mxu0 0.0
  %135 = vmatpush.msra.mxu0 0.0
  %136 = vmatpush.msra.mxu0 0.0
  %137 = vmatpush.msra.mxu0 0.0
  %138 = vmatpush.msra.mxu0 0.0
  %139 = vmatpush.msra.mxu0 0.0
  %140 = vmatpush.msra.mxu0 0.0
  %141 = vmatpush.msra.mxu0 0.0
  %142 = vmatpush.msra.mxu0 0.0
  %143 = vmatpush.msra.mxu0 0.0
  %144 = vmatpush.msra.mxu0 0.0
  %145 = vmatpush.msra.mxu0 0.0
  %146 = vmatpush.msra.mxu0 0.0
  %147 = vmatpush.msra.mxu0 0.0
  %148 = vmatpush.msra.mxu0 0.0
  %149 = vmatpush.msra.mxu0 %v37
  %150 = vmatmul.f32.gmra.mxu0 %v47
  %v151 = vpop.f32.mrf.mxu0
  %v152 = vadd.f32 0.0, %v151
  %153 = vmatmul.f32.gmra.mxu0 %v50
  %v154 = vpop.f32.mrf.mxu0
  %v155 = vadd.f32 0.0, %v154
  %156 = vmatmul.f32.gmra.mxu0 %v53
  %v157 = vpop.f32.mrf.mxu0
  %v158 = vadd.f32 0.0, %v157
  %159 = vmatmul.f32.gmra.mxu0 %v56
  %v160 = vpop.f32.mrf.mxu0
  %v161 = vadd.f32 0.0, %v160
  %162 = vmatmul.f32.gmra.mxu0 %v59
  %v163 = vpop.f32.mrf.mxu0
  %v164 = vadd.f32 0.0, %v163
  %165 = vmatmul.f32.gmra.mxu0 %v62
  %v166 = vpop.f32.mrf.mxu0
  %v167 = vadd.f32 0.0, %v166
  %168 = vdwg.mxu0
  %169 = vmatpush.msra.mxu0 0.0
  %170 = vmatpush.msra.mxu0 0.0
  %171 = vmatpush.msra.mxu0 0.0
  %172 = vmatpush.msra.mxu0 0.0
  %173 = vmatpush.msra.mxu0 0.0
  %174 = vmatpush.msra.mxu0 0.0
  %175 = vmatpush.msra.mxu0 0.0
  %176 = vmatpush.msra.mxu0 0.0
  %177 = vmatpush.msra.mxu0 0.0
  %178 = vmatpush.msra.mxu0 0.0
  %179 = vmatpush.msra.mxu0 0.0
  %180 = vmatpush.msra.mxu0 0.0
  %181 = vmatpush.msra.mxu0 0.0
  %182 = vmatpush.msra.mxu0 0.0
  %183 = vmatpush.msra.mxu0 0.0
  %184 = vmatpush.msra.mxu0 %v38
  %185 = vmatmul.f32.gmra.mxu0 %v47
  %v186 = vpop.f32.mrf.mxu0
  %v187 = vadd.f32 0.0, %v186
  %188 = vmatmul.f32.gmra.mxu0 %v50
  %v189 = vpop.f32.mrf.mxu0
  %v190 = vadd.f32 0.0, %v189
  %191 = vmatmul.f32.gmra.mxu0 %v53
  %v192 = vpop.f32.mrf.mxu0
  %v193 = vadd.f32 0.0, %v192
  %194 = vmatmul.f32.gmra.mxu0 %v56
  %v195 = vpop.f32.mrf.mxu0
  %v196 = vadd.f32 0.0, %v195
  %197 = vmatmul.f32.gmra.mxu0 %v59
  %v198 = vpop.f32.mrf.mxu0
  %v199 = vadd.f32 0.0, %v198
  %200 = vmatmul.f32.gmra.mxu0 %v62
  %v201 = vpop.f32.mrf.mxu0
  %v202 = vadd.f32 0.0, %v201
  %203 = vdwg.mxu0
  %v204 = vld [vmem:[%s2] sm:$0xff]
  %v205 = vld [vmem:[%s2 + $0x8] sm:$0xff]
  %v206 = vld [vmem:[%s2 + $0x10] sm:$0xff]
  %v207 = vld [vmem:[%s2 + $0x18] sm:$0xff]
  %v208 = vld [vmem:[%s2 + $0x20] sm:$0xff]
  %v209 = vld [vmem:[%s2 + $0x28] sm:$0xff]
  %v210 = vld [vmem:[%s3] sm:$0xff]
  %v211 = vld [vmem:[%s3 + $0x8] sm:$0xff]
  %v212 = vld [vmem:[%s3 + $0x10] sm:$0xff]
  %v213 = vld [vmem:[%s3 + $0x18] sm:$0xff]
  %v214 = vld [vmem:[%s3 + $0x20] sm:$0xff]
  %v215 = vld [vmem:[%s3 + $0x28] sm:$0xff]
  %v216 = vadd.f32 %v82, %v117
  %v217 = vadd.f32 %v216, %v152
  %v218 = vadd.f32 %v217, %v187
  %219 = vadd.xlane.f32.xlu0 %v218
  %v220 = vpop.xlane.xlu0 %219
  %v221 = vadd.f32 %v85, %v120
  %v222 = vadd.f32 %v221, %v155
  %v223 = vadd.f32 %v222, %v190
  %224 = vadd.xlane.f32.xlu0 %v223
  %v225 = vpop.xlane.xlu0 %224
  %v226 = vadd.f32 %v88, %v123
  %v227 = vadd.f32 %v226, %v158
  %v228 = vadd.f32 %v227, %v193
  %229 = vadd.xlane.f32.xlu0 %v228
  %v230 = vpop.xlane.xlu0 %229
  %v231 = vadd.f32 %v91, %v126
  %v232 = vadd.f32 %v231, %v161
  %v233 = vadd.f32 %v232, %v196
  %234 = vadd.xlane.f32.xlu0 %v233
  %v235 = vpop.xlane.xlu0 %234
  %v236 = vadd.f32 %v94, %v129
  %v237 = vadd.f32 %v236, %v164
  %v238 = vadd.f32 %v237, %v199
  %239 = vadd.xlane.f32.xlu0 %v238
  %v240 = vpop.xlane.xlu0 %239
  %v241 = vadd.f32 %v97, %v132
  %v242 = vadd.f32 %v241, %v167
  %v243 = vadd.f32 %v242, %v202
  %244 = vadd.xlane.f32.xlu0 %v243
  %v245 = vpop.xlane.xlu0 %244
  %v246 = vmul.f32 %v220, 0.001953125
  %v247 = vmul.f32 %v225, 0.001953125
  %v248 = vmul.f32 %v230, 0.001953125
  %v249 = vmul.f32 %v235, 0.001953125
  %v250 = vmul.f32 %v240, 0.001953125
  %v251 = vmul.f32 %v245, 0.001953125
  %v252 = vsub.f32 %v82, %v246
  %v253 = vsub.f32 %v117, %v246
  %v254 = vsub.f32 %v152, %v246
  %v255 = vsub.f32 %v187, %v246
  %v256 = vsub.f32 %v85, %v247
  %v257 = vsub.f32 %v120, %v247
  %v258 = vsub.f32 %v155, %v247
  %v259 = vsub.f32 %v190, %v247
  %v260 = vsub.f32 %v88, %v248
  %v261 = vsub.f32 %v123, %v248
  %v262 = vsub.f32 %v158, %v248
  %v263 = vsub.f32 %v193, %v248
  %v264 = vsub.f32 %v91, %v249
  %v265 = vsub.f32 %v126, %v249
  %v266 = vsub.f32 %v161, %v249
  %v267 = vsub.f32 %v196, %v249
  %v268 = vsub.f32 %v94, %v250
  %v269 = vsub.f32 %v129, %v250
  %v270 = vsub.f32 %v164, %v250
  %v271 = vsub.f32 %v199, %v250
  %v272 = vsub.f32 %v97, %v251
  %v273 = vsub.f32 %v132, %v251
  %v274 = vsub.f32 %v167, %v251
  %v275 = vsub.f32 %v202, %v251
  %v276 = vmul.f32 %v252, %v252
  %v277 = vmul.f32 %v253, %v253
  %v278 = vmul.f32 %v254, %v254
  %v279 = vmul.f32 %v255, %v255
  %v280 = vmul.f32 %v256, %v256
  %v281 = vmul.f32 %v257, %v257
  %v282 = vmul.f32 %v258, %v258
  %v283 = vmul.f32 %v259, %v259
  %v284 = vmul.f32 %v260, %v260
  %v285 = vmul.f32 %v261, %v261
  %v286 = vmul.f32 %v262, %v262
  %v287 = vmul.f32 %v263, %v263
  %v288 = vmul.f32 %v264, %v264
  %v289 = vmul.f32 %v265, %v265
  %v290 = vmul.f32 %v266, %v266
  %v291 = vmul.f32 %v267, %v267
  %v292 = vmul.f32 %v268, %v268
  %v293 = vmul.f32 %v269, %v269
  %v294 = vmul.f32 %v270, %v270
  %v295 = vmul.f32 %v271, %v271
  %v296 = vmul.f32 %v272, %v272
  %v297 = vmul.f32 %v273, %v273
  %v298 = vmul.f32 %v274, %v274
  %v299 = vmul.f32 %v275, %v275
  %v300 = vadd.f32 %v276, %v277
  %v301 = vadd.f32 %v300, %v278
  %v302 = vadd.f32 %v301, %v279
  %303 = vadd.xlane.f32.xlu0 %v302
  %v304 = vpop.xlane.xlu0 %303
  %v305 = vadd.f32 %v280, %v281
  %v306 = vadd.f32 %v305, %v282
  %v307 = vadd.f32 %v306, %v283
  %308 = vadd.xlane.f32.xlu0 %v307
  %v309 = vpop.xlane.xlu0 %308
  %v310 = vadd.f32 %v284, %v285
  %v311 = vadd.f32 %v310, %v286
  %v312 = vadd.f32 %v311, %v287
  %313 = vadd.xlane.f32.xlu0 %v312
  %v314 = vpop.xlane.xlu0 %313
  %v315 = vadd.f32 %v288, %v289
  %v316 = vadd.f32 %v315, %v290
  %v317 = vadd.f32 %v316, %v291
  %318 = vadd.xlane.f32.xlu0 %v317
  %v319 = vpop.xlane.xlu0 %318
  %v320 = vadd.f32 %v292, %v293
  %v321 = vadd.f32 %v320, %v294
  %v322 = vadd.f32 %v321, %v295
  %323 = vadd.xlane.f32.xlu0 %v322
  %v324 = vpop.xlane.xlu0 %323
  %v325 = vadd.f32 %v296, %v297
  %v326 = vadd.f32 %v325, %v298
  %v327 = vadd.f32 %v326, %v299
  %328 = vadd.xlane.f32.xlu0 %v327
  %v329 = vpop.xlane.xlu0 %328
  %v330 = vmul.f32 %v304, 0.001953125
  %v331 = vmul.f32 %v309, 0.001953125
  %v332 = vmul.f32 %v314, 0.001953125
  %v333 = vmul.f32 %v319, 0.001953125
  %v334 = vmul.f32 %v324, 0.001953125
  %v335 = vmul.f32 %v329, 0.001953125
  %v336 = vadd.f32 %v330, 1e-05
  %v337 = vadd.f32 %v331, 1e-05
  %v338 = vadd.f32 %v332, 1e-05
  %v339 = vadd.f32 %v333, 1e-05
  %v340 = vadd.f32 %v334, 1e-05
  %v341 = vadd.f32 %v335, 1e-05
  %v342 = vrsqrt.pop %v336
  %v343 = vmul.f32 %v342, %v336
  %v344 = vmul.f32 %v343, %v342
  %v345 = vmul.f32 0.5, %v344
  %v346 = vsub.f32 1.5, %v345
  %v347 = vmul.f32 %v342, %v346
  %vm348 = vweird.f32 %v336
  %vm349 = vweird.f32 %v342
  %vm350 = vmor %vm348, %vm349
  %v351 = vsel %vm350, %v342, %v347
  %v352 = vrsqrt.pop %v337
  %v353 = vmul.f32 %v352, %v337
  %v354 = vmul.f32 %v353, %v352
  %v355 = vmul.f32 0.5, %v354
  %v356 = vsub.f32 1.5, %v355
  %v357 = vmul.f32 %v352, %v356
  %vm358 = vweird.f32 %v337
  %vm359 = vweird.f32 %v352
  %vm360 = vmor %vm358, %vm359
  %v361 = vsel %vm360, %v352, %v357
  %v362 = vrsqrt.pop %v338
  %v363 = vmul.f32 %v362, %v338
  %v364 = vmul.f32 %v363, %v362
  %v365 = vmul.f32 0.5, %v364
  %v366 = vsub.f32 1.5, %v365
  %v367 = vmul.f32 %v362, %v366
  %vm368 = vweird.f32 %v338
  %vm369 = vweird.f32 %v362
  %vm370 = vmor %vm368, %vm369
  %v371 = vsel %vm370, %v362, %v367
  %v372 = vrsqrt.pop %v339
  %v373 = vmul.f32 %v372, %v339
  %v374 = vmul.f32 %v373, %v372
  %v375 = vmul.f32 0.5, %v374
  %v376 = vsub.f32 1.5, %v375
  %v377 = vmul.f32 %v372, %v376
  %vm378 = vweird.f32 %v339
  %vm379 = vweird.f32 %v372
  %vm380 = vmor %vm378, %vm379
  %v381 = vsel %vm380, %v372, %v377
  %v382 = vrsqrt.pop %v340
  %v383 = vmul.f32 %v382, %v340
  %v384 = vmul.f32 %v383, %v382
  %v385 = vmul.f32 0.5, %v384
  %v386 = vsub.f32 1.5, %v385
  %v387 = vmul.f32 %v382, %v386
  %vm388 = vweird.f32 %v340
  %vm389 = vweird.f32 %v382
  %vm390 = vmor %vm388, %vm389
  %v391 = vsel %vm390, %v382, %v387
  %v392 = vrsqrt.pop %v341
  %v393 = vmul.f32 %v392, %v341
  %v394 = vmul.f32 %v393, %v392
  %v395 = vmul.f32 0.5, %v394
  %v396 = vsub.f32 1.5, %v395
  %v397 = vmul.f32 %v392, %v396
  %vm398 = vweird.f32 %v341
  %vm399 = vweird.f32 %v392
  %vm400 = vmor %vm398, %vm399
  %v401 = vsel %vm400, %v392, %v397
  %v402 = vmul.f32 %v252, %v351
  %v403 = vmul.f32 %v253, %v351
  %v404 = vmul.f32 %v254, %v351
  %v405 = vmul.f32 %v255, %v351
  %v406 = vmul.f32 %v256, %v361
  %v407 = vmul.f32 %v257, %v361
  %v408 = vmul.f32 %v258, %v361
  %v409 = vmul.f32 %v259, %v361
  %v410 = vmul.f32 %v260, %v371
  %v411 = vmul.f32 %v261, %v371
  %v412 = vmul.f32 %v262, %v371
  %v413 = vmul.f32 %v263, %v371
  %v414 = vmul.f32 %v264, %v381
  %v415 = vmul.f32 %v265, %v381
  %v416 = vmul.f32 %v266, %v381
  %v417 = vmul.f32 %v267, %v381
  %v418 = vmul.f32 %v268, %v391
  %v419 = vmul.f32 %v269, %v391
  %v420 = vmul.f32 %v270, %v391
  %v421 = vmul.f32 %v271, %v391
  %v422 = vmul.f32 %v272, %v401
  %v423 = vmul.f32 %v273, %v401
  %v424 = vmul.f32 %v274, %v401
  %v425 = vmul.f32 %v275, %v401
  %427 = vset.pattern.permute.xlu0 0
  %428 = vperm.xlu0 %427, %v204
  %v429 = vpop.permute.xlu0 %428
  %432 = vset.pattern.permute.xlu0 0
  %433 = vperm.xlu0 %432, %v205
  %v434 = vpop.permute.xlu0 %433
  %437 = vset.pattern.permute.xlu0 0
  %438 = vperm.xlu0 %437, %v206
  %v439 = vpop.permute.xlu0 %438
  %442 = vset.pattern.permute.xlu0 0
  %443 = vperm.xlu0 %442, %v207
  %v444 = vpop.permute.xlu0 %443
  %447 = vset.pattern.permute.xlu0 0
  %448 = vperm.xlu0 %447, %v208
  %v449 = vpop.permute.xlu0 %448
  %452 = vset.pattern.permute.xlu0 0
  %453 = vperm.xlu0 %452, %v209
  %v454 = vpop.permute.xlu0 %453
  %v456 = vmul.f32 %v402, %v429
  %v457 = vmul.f32 %v403, %v429
  %v458 = vmul.f32 %v404, %v429
  %v459 = vmul.f32 %v405, %v429
  %v460 = vmul.f32 %v406, %v434
  %v461 = vmul.f32 %v407, %v434
  %v462 = vmul.f32 %v408, %v434
  %v463 = vmul.f32 %v409, %v434
  %v464 = vmul.f32 %v410, %v439
  %v465 = vmul.f32 %v411, %v439
  %v466 = vmul.f32 %v412, %v439
  %v467 = vmul.f32 %v413, %v439
  %v468 = vmul.f32 %v414, %v444
  %v469 = vmul.f32 %v415, %v444
  %v470 = vmul.f32 %v416, %v444
  %v471 = vmul.f32 %v417, %v444
  %v472 = vmul.f32 %v418, %v449
  %v473 = vmul.f32 %v419, %v449
  %v474 = vmul.f32 %v420, %v449
  %v475 = vmul.f32 %v421, %v449
  %v476 = vmul.f32 %v422, %v454
  %v477 = vmul.f32 %v423, %v454
  %v478 = vmul.f32 %v424, %v454
  %v479 = vmul.f32 %v425, %v454
  %481 = vset.pattern.permute.xlu0 0
  %482 = vperm.xlu0 %481, %v210
  %v483 = vpop.permute.xlu0 %482
  %486 = vset.pattern.permute.xlu0 0
  %487 = vperm.xlu0 %486, %v211
  %v488 = vpop.permute.xlu0 %487
  %491 = vset.pattern.permute.xlu0 0
  %492 = vperm.xlu0 %491, %v212
  %v493 = vpop.permute.xlu0 %492
  %496 = vset.pattern.permute.xlu0 0
  %497 = vperm.xlu0 %496, %v213
  %v498 = vpop.permute.xlu0 %497
  %501 = vset.pattern.permute.xlu0 0
  %502 = vperm.xlu0 %501, %v214
  %v503 = vpop.permute.xlu0 %502
  %506 = vset.pattern.permute.xlu0 0
  %507 = vperm.xlu0 %506, %v215
  %v508 = vpop.permute.xlu0 %507
  %v510 = vadd.f32 %v456, %v483
  %v511 = vadd.f32 %v457, %v483
  %v512 = vadd.f32 %v458, %v483
  %v513 = vadd.f32 %v459, %v483
  %v514 = vadd.f32 %v460, %v488
  %v515 = vadd.f32 %v461, %v488
  %v516 = vadd.f32 %v462, %v488
  %v517 = vadd.f32 %v463, %v488
  %v518 = vadd.f32 %v464, %v493
  %v519 = vadd.f32 %v465, %v493
  %v520 = vadd.f32 %v466, %v493
  %v521 = vadd.f32 %v467, %v493
  %v522 = vadd.f32 %v468, %v498
  %v523 = vadd.f32 %v469, %v498
  %v524 = vadd.f32 %v470, %v498
  %v525 = vadd.f32 %v471, %v498
  %v526 = vadd.f32 %v472, %v503
  %v527 = vadd.f32 %v473, %v503
  %v528 = vadd.f32 %v474, %v503
  %v529 = vadd.f32 %v475, %v503
  %v530 = vadd.f32 %v476, %v508
  %v531 = vadd.f32 %v477, %v508
  %v532 = vadd.f32 %v478, %v508
  %v533 = vadd.f32 %v479, %v508
  %v534 = vmax.f32 %v510, 0.0
  %v535 = vmax.f32 %v511, 0.0
  %v536 = vmax.f32 %v512, 0.0
  %v537 = vmax.f32 %v513, 0.0
  %v538 = vmax.f32 %v514, 0.0
  %v539 = vmax.f32 %v515, 0.0
  %v540 = vmax.f32 %v516, 0.0
  %v541 = vmax.f32 %v517, 0.0
  %v542 = vmax.f32 %v518, 0.0
  %v543 = vmax.f32 %v519, 0.0
  %v544 = vmax.f32 %v520, 0.0
  %v545 = vmax.f32 %v521, 0.0
  %v546 = vmax.f32 %v522, 0.0
  %v547 = vmax.f32 %v523, 0.0
  %v548 = vmax.f32 %v524, 0.0
  %v549 = vmax.f32 %v525, 0.0
  %v550 = vmax.f32 %v526, 0.0
  %v551 = vmax.f32 %v527, 0.0
  %v552 = vmax.f32 %v528, 0.0
  %v553 = vmax.f32 %v529, 0.0
  %v554 = vmax.f32 %v530, 0.0
  %v555 = vmax.f32 %v531, 0.0
  %v556 = vmax.f32 %v532, 0.0
  %v557 = vmax.f32 %v533, 0.0
  %v558 = vmin.f32 %v534, 6.0
  %v559 = vmin.f32 %v535, 6.0
  %v560 = vmin.f32 %v536, 6.0
  %v561 = vmin.f32 %v537, 6.0
  %v562 = vmin.f32 %v538, 6.0
  %v563 = vmin.f32 %v539, 6.0
  %v564 = vmin.f32 %v540, 6.0
  %v565 = vmin.f32 %v541, 6.0
  %v566 = vmin.f32 %v542, 6.0
  %v567 = vmin.f32 %v543, 6.0
  %v568 = vmin.f32 %v544, 6.0
  %v569 = vmin.f32 %v545, 6.0
  %v570 = vmin.f32 %v546, 6.0
  %v571 = vmin.f32 %v547, 6.0
  %v572 = vmin.f32 %v548, 6.0
  %v573 = vmin.f32 %v549, 6.0
  %v574 = vmin.f32 %v550, 6.0
  %v575 = vmin.f32 %v551, 6.0
  %v576 = vmin.f32 %v552, 6.0
  %v577 = vmin.f32 %v553, 6.0
  %v578 = vmin.f32 %v554, 6.0
  %v579 = vmin.f32 %v555, 6.0
  %v580 = vmin.f32 %v556, 6.0
  %v581 = vmin.f32 %v557, 6.0
  %v582 = vld [vmem:[%s4] sm:$0xff]
  %v583 = vld [vmem:[%s4 + $0x8] sm:$0xff]
  %v584 = vld [vmem:[%s4 + $0x10] sm:$0xff]
  %v585 = vld [vmem:[%s4 + $0x18] sm:$0xff]
  %v586 = vld [vmem:[%s4 + $0x20] sm:$0xff]
  %v587 = vld [vmem:[%s4 + $0x28] sm:$0xff]
  %v588 = vld [vmem:[%s5] sm:$0xff]
  %v589 = vld [vmem:[%s5 + $0x8] sm:$0xff]
  %v590 = vld [vmem:[%s5 + $0x10] sm:$0xff]
  %v591 = vld [vmem:[%s5 + $0x18] sm:$0xff]
  %v592 = vld [vmem:[%s5 + $0x20] sm:$0xff]
  %v593 = vld [vmem:[%s5 + $0x28] sm:$0xff]
  %v594 = vld [vmem:[%s6] sm:$0xff]
  %v595 = vld [vmem:[%s6 + $0x8] sm:$0xff]
  %v596 = vld [vmem:[%s6 + $0x10] sm:$0xff]
  %v597 = vld [vmem:[%s6 + $0x18] sm:$0xff]
  %v598 = vld [vmem:[%s6 + $0x20] sm:$0xff]
  %v599 = vld [vmem:[%s6 + $0x28] sm:$0xff]
  %v600 = vld [vmem:[%s7] sm:$0xff]
  %v601 = vld [vmem:[%s8] sm:$0xff]
  %v602 = vld [vmem:[%s9] sm:$0xff]
  %v603 = vlaneseq
  %v604 = vand.u32 %v603, 127
  %v605 = vadd.s32 %v604, 128
  %v606 = vadd.s32 %v604, 256
  %v607 = vadd.s32 %v604, 384
  %vm608 = vcmp.lt.s32.totalorder %v604, 0
  %v609 = vsub.s32 0, %v604
  %v610 = vsel %vm608, %v609, %v604
  %v611 = vshrl.u32 %v610, 4
  %v612 = vand.u32 %v610, 15
  %v613 = vsub.s32 0, %v612
  %v614 = vsel %vm608, %v613, %v612
  %vm615 = vcmp.lt.s32.totalorder %v605, 0
  %v616 = vsub.s32 0, %v605
  %v617 = vsel %vm615, %v616, %v605
  %v618 = vshrl.u32 %v617, 4
  %v619 = vand.u32 %v617, 15
  %v620 = vsub.s32 0, %v619
  %v621 = vsel %vm615, %v620, %v619
  %vm622 = vcmp.lt.s32.totalorder %v606, 0
  %v623 = vsub.s32 0, %v606
  %v624 = vsel %vm622, %v623, %v606
  %v625 = vshrl.u32 %v624, 4
  %v626 = vand.u32 %v624, 15
  %v627 = vsub.s32 0, %v626
  %v628 = vsel %vm622, %v627, %v626
  %vm629 = vcmp.lt.s32.totalorder %v607, 0
  %v630 = vsub.s32 0, %v607
  %v631 = vsel %vm629, %v630, %v607
  %v632 = vshrl.u32 %v631, 4
  %v633 = vand.u32 %v631, 15
  %v634 = vsub.s32 0, %v633
  %v635 = vsel %vm629, %v634, %v633
  %vm636 = vcmp.ne.s32.totalorder %v614, 0
  %vm637 = vcmp.ne.s32.totalorder %v621, 0
  %vm638 = vcmp.ne.s32.totalorder %v628, 0
  %vm639 = vcmp.ne.s32.totalorder %v635, 0
  %vm640 = vcmp.lt.s32.totalorder %v614, 0
  %vm641 = vcmp.lt.s32.totalorder %v621, 0
  %vm642 = vcmp.lt.s32.totalorder %v628, 0
  %vm643 = vcmp.lt.s32.totalorder %v635, 0
  %vm644 = vmand %vm640, %vm636
  %vm645 = vmand %vm641, %vm637
  %vm646 = vmand %vm642, %vm638
  %vm647 = vmand %vm643, %vm639
  %v648 = vadd.s32 %v614, 16
  %v649 = vadd.s32 %v621, 16
  %v650 = vadd.s32 %v628, 16
  %v651 = vadd.s32 %v635, 16
  %v652 = vsel %vm644, %v648, %v614
  %v653 = vsel %vm645, %v649, %v621
  %v654 = vsel %vm646, %v650, %v628
  %v655 = vsel %vm647, %v651, %v635
  %vm656 = vcmp.lt.s32.totalorder %v604, 0
  %v657 = vsub.s32 0, %v604
  %v658 = vsel %vm656, %v657, %v604
  %v659 = vshrl.u32 %v658, 8
  %v660 = vand.u32 %v658, 255
  %v661 = vsub.s32 0, %v660
  %v662 = vsel %vm656, %v661, %v660
  %vm663 = vcmp.lt.s32.totalorder %v605, 0
  %v664 = vsub.s32 0, %v605
  %v665 = vsel %vm663, %v664, %v605
  %v666 = vshrl.u32 %v665, 8
  %v667 = vand.u32 %v665, 255
  %v668 = vsub.s32 0, %v667
  %v669 = vsel %vm663, %v668, %v667
  %vm670 = vcmp.lt.s32.totalorder %v606, 0
  %v671 = vsub.s32 0, %v606
  %v672 = vsel %vm670, %v671, %v606
  %v673 = vshrl.u32 %v672, 8
  %v674 = vand.u32 %v672, 255
  %v675 = vsub.s32 0, %v674
  %v676 = vsel %vm670, %v675, %v674
  %vm677 = vcmp.lt.s32.totalorder %v607, 0
  %v678 = vsub.s32 0, %v607
  %v679 = vsel %vm677, %v678, %v607
  %v680 = vshrl.u32 %v679, 8
  %v681 = vand.u32 %v679, 255
  %v682 = vsub.s32 0, %v681
  %v683 = vsel %vm677, %v682, %v681
  %vm684 = vcmp.ne.s32.totalorder %v662, 0
  %vm685 = vcmp.ne.s32.totalorder %v669, 0
  %vm686 = vcmp.ne.s32.totalorder %v676, 0
  %vm687 = vcmp.ne.s32.totalorder %v683, 0
  %vm688 = vcmp.lt.s32.totalorder %v662, 0
  %vm689 = vcmp.lt.s32.totalorder %v669, 0
  %vm690 = vcmp.lt.s32.totalorder %v676, 0
  %vm691 = vcmp.lt.s32.totalorder %v683, 0
  %vm692 = vmand %vm688, %vm684
  %vm693 = vmand %vm689, %vm685
  %vm694 = vmand %vm690, %vm686
  %vm695 = vmand %vm691, %vm687
  %v696 = vadd.s32 %v662, 256
  %v697 = vadd.s32 %v669, 256
  %v698 = vadd.s32 %v676, 256
  %v699 = vadd.s32 %v683, 256
  %v700 = vsel %vm692, %v696, %v662
  %v701 = vsel %vm693, %v697, %v669
  %v702 = vsel %vm694, %v698, %v676
  %v703 = vsel %vm695, %v699, %v683
  %vm704 = vcmp.ge.s32.totalorder %v700, 16
  %vm705 = vcmp.ge.s32.totalorder %v701, 16
  %vm706 = vcmp.ge.s32.totalorder %v702, 16
  %vm707 = vcmp.ge.s32.totalorder %v703, 16
  %v708 = vsel %vm704, 1, 0
  %v709 = vsel %vm705, 1, 0
  %v710 = vsel %vm706, 1, 0
  %v711 = vsel %vm707, 1, 0
  %v712 = vcvt.s32.f32 %v708
  %v713 = vcvt.s32.f32 %v709
  %v714 = vcvt.s32.f32 %v710
  %v715 = vcvt.s32.f32 %v711
  %vm716 = vcmp.lt.s32.totalorder %v700, 240
  %vm717 = vcmp.lt.s32.totalorder %v701, 240
  %vm718 = vcmp.lt.s32.totalorder %v702, 240
  %vm719 = vcmp.lt.s32.totalorder %v703, 240
  %v720 = vsel %vm716, 1, 0
  %v721 = vsel %vm717, 1, 0
  %v722 = vsel %vm718, 1, 0
  %v723 = vsel %vm719, 1, 0
  %v724 = vcvt.s32.f32 %v720
  %v725 = vcvt.s32.f32 %v721
  %v726 = vcvt.s32.f32 %v722
  %v727 = vcvt.s32.f32 %v723
  %vm728 = vcmp.ge.s32.totalorder %v652, 1
  %vm729 = vcmp.ge.s32.totalorder %v653, 1
  %vm730 = vcmp.ge.s32.totalorder %v654, 1
  %vm731 = vcmp.ge.s32.totalorder %v655, 1
  %v732 = vsel %vm728, 1, 0
  %v733 = vsel %vm729, 1, 0
  %v734 = vsel %vm730, 1, 0
  %v735 = vsel %vm731, 1, 0
  %v736 = vcvt.s32.f32 %v732
  %v737 = vcvt.s32.f32 %v733
  %v738 = vcvt.s32.f32 %v734
  %v739 = vcvt.s32.f32 %v735
  %vm740 = vcmp.le.s32.totalorder %v652, 14
  %vm741 = vcmp.le.s32.totalorder %v653, 14
  %vm742 = vcmp.le.s32.totalorder %v654, 14
  %vm743 = vcmp.le.s32.totalorder %v655, 14
  %v744 = vsel %vm740, 1, 0
  %v745 = vsel %vm741, 1, 0
  %v746 = vsel %vm742, 1, 0
  %v747 = vsel %vm743, 1, 0
  %v748 = vcvt.s32.f32 %v744
  %v749 = vcvt.s32.f32 %v745
  %v750 = vcvt.s32.f32 %v746
  %v751 = vcvt.s32.f32 %v747
  %752 = vrot.lane.b32.xlu0 %v558, 17
  %v753 = vpop.permute.xlu0 %752
  %754 = vrot.lane.b32.xlu0 %v562, 17
  %v755 = vpop.permute.xlu0 %754
  %756 = vrot.lane.b32.xlu0 %v566, 17
  %v757 = vpop.permute.xlu0 %756
  %758 = vrot.lane.b32.xlu0 %v570, 17
  %v759 = vpop.permute.xlu0 %758
  %760 = vrot.lane.b32.xlu0 %v574, 17
  %v761 = vpop.permute.xlu0 %760
  %762 = vrot.lane.b32.xlu0 %v578, 17
  %v763 = vpop.permute.xlu0 %762
  %764 = vrot.lane.b32.xlu0 %v559, 17
  %v765 = vpop.permute.xlu0 %764
  %766 = vrot.lane.b32.xlu0 %v563, 17
  %v767 = vpop.permute.xlu0 %766
  %768 = vrot.lane.b32.xlu0 %v567, 17
  %v769 = vpop.permute.xlu0 %768
  %770 = vrot.lane.b32.xlu0 %v571, 17
  %v771 = vpop.permute.xlu0 %770
  %772 = vrot.lane.b32.xlu0 %v575, 17
  %v773 = vpop.permute.xlu0 %772
  %774 = vrot.lane.b32.xlu0 %v579, 17
  %v775 = vpop.permute.xlu0 %774
  %776 = vrot.lane.b32.xlu0 %v560, 17
  %v777 = vpop.permute.xlu0 %776
  %778 = vrot.lane.b32.xlu0 %v564, 17
  %v779 = vpop.permute.xlu0 %778
  %780 = vrot.lane.b32.xlu0 %v568, 17
  %v781 = vpop.permute.xlu0 %780
  %782 = vrot.lane.b32.xlu0 %v572, 17
  %v783 = vpop.permute.xlu0 %782
  %784 = vrot.lane.b32.xlu0 %v576, 17
  %v785 = vpop.permute.xlu0 %784
  %786 = vrot.lane.b32.xlu0 %v580, 17
  %v787 = vpop.permute.xlu0 %786
  %788 = vrot.lane.b32.xlu0 %v561, 17
  %v789 = vpop.permute.xlu0 %788
  %790 = vrot.lane.b32.xlu0 %v565, 17
  %v791 = vpop.permute.xlu0 %790
  %792 = vrot.lane.b32.xlu0 %v569, 17
  %v793 = vpop.permute.xlu0 %792
  %794 = vrot.lane.b32.xlu0 %v573, 17
  %v795 = vpop.permute.xlu0 %794
  %796 = vrot.lane.b32.xlu0 %v577, 17
  %v797 = vpop.permute.xlu0 %796
  %798 = vrot.lane.b32.xlu0 %v581, 17
  %v799 = vpop.permute.xlu0 %798
  %vm800 = vcmp.lt.s32.totalorder %v604, 17
  %v801 = vsel %vm800, %v777, %v789
  %v802 = vsel %vm800, %v779, %v791
  %v803 = vsel %vm800, %v781, %v793
  %v804 = vsel %vm800, %v783, %v795
  %v805 = vsel %vm800, %v785, %v797
  %v806 = vsel %vm800, %v787, %v799
  %v807 = vsel %vm800, %v765, %v777
  %v808 = vsel %vm800, %v767, %v779
  %v809 = vsel %vm800, %v769, %v781
  %v810 = vsel %vm800, %v771, %v783
  %v811 = vsel %vm800, %v773, %v785
  %v812 = vsel %vm800, %v775, %v787
  %v813 = vsel %vm800, %v753, %v765
  %v814 = vsel %vm800, %v755, %v767
  %v815 = vsel %vm800, %v757, %v769
  %v816 = vsel %vm800, %v759, %v771
  %v817 = vsel %vm800, %v761, %v773
  %v818 = vsel %vm800, %v763, %v775
  %v819 = vsel %vm800, %v789, %v753
  %v820 = vsel %vm800, %v791, %v755
  %v821 = vsel %vm800, %v793, %v757
  %v822 = vsel %vm800, %v795, %v759
  %v823 = vsel %vm800, %v797, %v761
  %v824 = vsel %vm800, %v799, %v763
  %826 = vset.pattern.permute.xlu0 0
  %827 = vperm.xlu0 %826, %v582
  %v828 = vpop.permute.xlu0 %827
  %831 = vset.pattern.permute.xlu0 0
  %832 = vperm.xlu0 %831, %v583
  %v833 = vpop.permute.xlu0 %832
  %836 = vset.pattern.permute.xlu0 0
  %837 = vperm.xlu0 %836, %v584
  %v838 = vpop.permute.xlu0 %837
  %841 = vset.pattern.permute.xlu0 0
  %842 = vperm.xlu0 %841, %v585
  %v843 = vpop.permute.xlu0 %842
  %846 = vset.pattern.permute.xlu0 0
  %847 = vperm.xlu0 %846, %v586
  %v848 = vpop.permute.xlu0 %847
  %851 = vset.pattern.permute.xlu0 0
  %852 = vperm.xlu0 %851, %v587
  %v853 = vpop.permute.xlu0 %852
  %v855 = vmul.f32 %v819, %v828
  %v856 = vmul.f32 %v813, %v828
  %v857 = vmul.f32 %v807, %v828
  %v858 = vmul.f32 %v801, %v828
  %v859 = vmul.f32 %v820, %v833
  %v860 = vmul.f32 %v814, %v833
  %v861 = vmul.f32 %v808, %v833
  %v862 = vmul.f32 %v802, %v833
  %v863 = vmul.f32 %v821, %v838
  %v864 = vmul.f32 %v815, %v838
  %v865 = vmul.f32 %v809, %v838
  %v866 = vmul.f32 %v803, %v838
  %v867 = vmul.f32 %v822, %v843
  %v868 = vmul.f32 %v816, %v843
  %v869 = vmul.f32 %v810, %v843
  %v870 = vmul.f32 %v804, %v843
  %v871 = vmul.f32 %v823, %v848
  %v872 = vmul.f32 %v817, %v848
  %v873 = vmul.f32 %v811, %v848
  %v874 = vmul.f32 %v805, %v848
  %v875 = vmul.f32 %v824, %v853
  %v876 = vmul.f32 %v818, %v853
  %v877 = vmul.f32 %v812, %v853
  %v878 = vmul.f32 %v806, %v853
  %v879 = vmul.f32 %v855, %v736
  %v880 = vmul.f32 %v856, %v737
  %v881 = vmul.f32 %v857, %v738
  %v882 = vmul.f32 %v858, %v739
  %v883 = vmul.f32 %v859, %v736
  %v884 = vmul.f32 %v860, %v737
  %v885 = vmul.f32 %v861, %v738
  %v886 = vmul.f32 %v862, %v739
  %v887 = vmul.f32 %v863, %v736
  %v888 = vmul.f32 %v864, %v737
  %v889 = vmul.f32 %v865, %v738
  %v890 = vmul.f32 %v866, %v739
  %v891 = vmul.f32 %v867, %v736
  %v892 = vmul.f32 %v868, %v737
  %v893 = vmul.f32 %v869, %v738
  %v894 = vmul.f32 %v870, %v739
  %v895 = vmul.f32 %v871, %v736
  %v896 = vmul.f32 %v872, %v737
  %v897 = vmul.f32 %v873, %v738
  %v898 = vmul.f32 %v874, %v739
  %v899 = vmul.f32 %v875, %v736
  %v900 = vmul.f32 %v876, %v737
  %v901 = vmul.f32 %v877, %v738
  %v902 = vmul.f32 %v878, %v739
  %903 = vrot.lane.b32.xlu0 %v558, 16
  %v904 = vpop.permute.xlu0 %903
  %905 = vrot.lane.b32.xlu0 %v562, 16
  %v906 = vpop.permute.xlu0 %905
  %907 = vrot.lane.b32.xlu0 %v566, 16
  %v908 = vpop.permute.xlu0 %907
  %909 = vrot.lane.b32.xlu0 %v570, 16
  %v910 = vpop.permute.xlu0 %909
  %911 = vrot.lane.b32.xlu0 %v574, 16
  %v912 = vpop.permute.xlu0 %911
  %913 = vrot.lane.b32.xlu0 %v578, 16
  %v914 = vpop.permute.xlu0 %913
  %915 = vrot.lane.b32.xlu0 %v559, 16
  %v916 = vpop.permute.xlu0 %915
  %917 = vrot.lane.b32.xlu0 %v563, 16
  %v918 = vpop.permute.xlu0 %917
  %919 = vrot.lane.b32.xlu0 %v567, 16
  %v920 = vpop.permute.xlu0 %919
  %921 = vrot.lane.b32.xlu0 %v571, 16
  %v922 = vpop.permute.xlu0 %921
  %923 = vrot.lane.b32.xlu0 %v575, 16
  %v924 = vpop.permute.xlu0 %923
  %925 = vrot.lane.b32.xlu0 %v579, 16
  %v926 = vpop.permute.xlu0 %925
  %927 = vrot.lane.b32.xlu0 %v560, 16
  %v928 = vpop.permute.xlu0 %927
  %929 = vrot.lane.b32.xlu0 %v564, 16
  %v930 = vpop.permute.xlu0 %929
  %931 = vrot.lane.b32.xlu0 %v568, 16
  %v932 = vpop.permute.xlu0 %931
  %933 = vrot.lane.b32.xlu0 %v572, 16
  %v934 = vpop.permute.xlu0 %933
  %935 = vrot.lane.b32.xlu0 %v576, 16
  %v936 = vpop.permute.xlu0 %935
  %937 = vrot.lane.b32.xlu0 %v580, 16
  %v938 = vpop.permute.xlu0 %937
  %939 = vrot.lane.b32.xlu0 %v561, 16
  %v940 = vpop.permute.xlu0 %939
  %941 = vrot.lane.b32.xlu0 %v565, 16
  %v942 = vpop.permute.xlu0 %941
  %943 = vrot.lane.b32.xlu0 %v569, 16
  %v944 = vpop.permute.xlu0 %943
  %945 = vrot.lane.b32.xlu0 %v573, 16
  %v946 = vpop.permute.xlu0 %945
  %947 = vrot.lane.b32.xlu0 %v577, 16
  %v948 = vpop.permute.xlu0 %947
  %949 = vrot.lane.b32.xlu0 %v581, 16
  %v950 = vpop.permute.xlu0 %949
  %vm951 = vcmp.lt.s32.totalorder %v604, 16
  %v952 = vsel %vm951, %v928, %v940
  %v953 = vsel %vm951, %v930, %v942
  %v954 = vsel %vm951, %v932, %v944
  %v955 = vsel %vm951, %v934, %v946
  %v956 = vsel %vm951, %v936, %v948
  %v957 = vsel %vm951, %v938, %v950
  %v958 = vsel %vm951, %v916, %v928
  %v959 = vsel %vm951, %v918, %v930
  %v960 = vsel %vm951, %v920, %v932
  %v961 = vsel %vm951, %v922, %v934
  %v962 = vsel %vm951, %v924, %v936
  %v963 = vsel %vm951, %v926, %v938
  %v964 = vsel %vm951, %v904, %v916
  %v965 = vsel %vm951, %v906, %v918
  %v966 = vsel %vm951, %v908, %v920
  %v967 = vsel %vm951, %v910, %v922
  %v968 = vsel %vm951, %v912, %v924
  %v969 = vsel %vm951, %v914, %v926
  %v970 = vsel %vm951, %v940, %v904
  %v971 = vsel %vm951, %v942, %v906
  %v972 = vsel %vm951, %v944, %v908
  %v973 = vsel %vm951, %v946, %v910
  %v974 = vsel %vm951, %v948, %v912
  %v975 = vsel %vm951, %v950, %v914
  %976 = vset.pattern.permute.xlu0 1
  %977 = vperm.xlu0 %976, %v582
  %v978 = vpop.permute.xlu0 %977
  %980 = vset.pattern.permute.xlu0 1
  %981 = vperm.xlu0 %980, %v583
  %v982 = vpop.permute.xlu0 %981
  %984 = vset.pattern.permute.xlu0 1
  %985 = vperm.xlu0 %984, %v584
  %v986 = vpop.permute.xlu0 %985
  %988 = vset.pattern.permute.xlu0 1
  %989 = vperm.xlu0 %988, %v585
  %v990 = vpop.permute.xlu0 %989
  %992 = vset.pattern.permute.xlu0 1
  %993 = vperm.xlu0 %992, %v586
  %v994 = vpop.permute.xlu0 %993
  %996 = vset.pattern.permute.xlu0 1
  %997 = vperm.xlu0 %996, %v587
  %v998 = vpop.permute.xlu0 %997
  %v1000 = vmul.f32 %v970, %v978
  %v1001 = vmul.f32 %v964, %v978
  %v1002 = vmul.f32 %v958, %v978
  %v1003 = vmul.f32 %v952, %v978
  %v1004 = vmul.f32 %v971, %v982
  %v1005 = vmul.f32 %v965, %v982
  %v1006 = vmul.f32 %v959, %v982
  %v1007 = vmul.f32 %v953, %v982
  %v1008 = vmul.f32 %v972, %v986
  %v1009 = vmul.f32 %v966, %v986
  %v1010 = vmul.f32 %v960, %v986
  %v1011 = vmul.f32 %v954, %v986
  %v1012 = vmul.f32 %v973, %v990
  %v1013 = vmul.f32 %v967, %v990
  %v1014 = vmul.f32 %v961, %v990
  %v1015 = vmul.f32 %v955, %v990
  %v1016 = vmul.f32 %v974, %v994
  %v1017 = vmul.f32 %v968, %v994
  %v1018 = vmul.f32 %v962, %v994
  %v1019 = vmul.f32 %v956, %v994
  %v1020 = vmul.f32 %v975, %v998
  %v1021 = vmul.f32 %v969, %v998
  %v1022 = vmul.f32 %v963, %v998
  %v1023 = vmul.f32 %v957, %v998
  %v1024 = vadd.f32 %v879, %v1000
  %v1025 = vadd.f32 %v880, %v1001
  %v1026 = vadd.f32 %v881, %v1002
  %v1027 = vadd.f32 %v882, %v1003
  %v1028 = vadd.f32 %v883, %v1004
  %v1029 = vadd.f32 %v884, %v1005
  %v1030 = vadd.f32 %v885, %v1006
  %v1031 = vadd.f32 %v886, %v1007
  %v1032 = vadd.f32 %v887, %v1008
  %v1033 = vadd.f32 %v888, %v1009
  %v1034 = vadd.f32 %v889, %v1010
  %v1035 = vadd.f32 %v890, %v1011
  %v1036 = vadd.f32 %v891, %v1012
  %v1037 = vadd.f32 %v892, %v1013
  %v1038 = vadd.f32 %v893, %v1014
  %v1039 = vadd.f32 %v894, %v1015
  %v1040 = vadd.f32 %v895, %v1016
  %v1041 = vadd.f32 %v896, %v1017
  %v1042 = vadd.f32 %v897, %v1018
  %v1043 = vadd.f32 %v898, %v1019
  %v1044 = vadd.f32 %v899, %v1020
  %v1045 = vadd.f32 %v900, %v1021
  %v1046 = vadd.f32 %v901, %v1022
  %v1047 = vadd.f32 %v902, %v1023
  %1048 = vrot.lane.b32.xlu0 %v558, 15
  %v1049 = vpop.permute.xlu0 %1048
  %1050 = vrot.lane.b32.xlu0 %v562, 15
  %v1051 = vpop.permute.xlu0 %1050
  %1052 = vrot.lane.b32.xlu0 %v566, 15
  %v1053 = vpop.permute.xlu0 %1052
  %1054 = vrot.lane.b32.xlu0 %v570, 15
  %v1055 = vpop.permute.xlu0 %1054
  %1056 = vrot.lane.b32.xlu0 %v574, 15
  %v1057 = vpop.permute.xlu0 %1056
  %1058 = vrot.lane.b32.xlu0 %v578, 15
  %v1059 = vpop.permute.xlu0 %1058
  %1060 = vrot.lane.b32.xlu0 %v559, 15
  %v1061 = vpop.permute.xlu0 %1060
  %1062 = vrot.lane.b32.xlu0 %v563, 15
  %v1063 = vpop.permute.xlu0 %1062
  %1064 = vrot.lane.b32.xlu0 %v567, 15
  %v1065 = vpop.permute.xlu0 %1064
  %1066 = vrot.lane.b32.xlu0 %v571, 15
  %v1067 = vpop.permute.xlu0 %1066
  %1068 = vrot.lane.b32.xlu0 %v575, 15
  %v1069 = vpop.permute.xlu0 %1068
  %1070 = vrot.lane.b32.xlu0 %v579, 15
  %v1071 = vpop.permute.xlu0 %1070
  %1072 = vrot.lane.b32.xlu0 %v560, 15
  %v1073 = vpop.permute.xlu0 %1072
  %1074 = vrot.lane.b32.xlu0 %v564, 15
  %v1075 = vpop.permute.xlu0 %1074
  %1076 = vrot.lane.b32.xlu0 %v568, 15
  %v1077 = vpop.permute.xlu0 %1076
  %1078 = vrot.lane.b32.xlu0 %v572, 15
  %v1079 = vpop.permute.xlu0 %1078
  %1080 = vrot.lane.b32.xlu0 %v576, 15
  %v1081 = vpop.permute.xlu0 %1080
  %1082 = vrot.lane.b32.xlu0 %v580, 15
  %v1083 = vpop.permute.xlu0 %1082
  %1084 = vrot.lane.b32.xlu0 %v561, 15
  %v1085 = vpop.permute.xlu0 %1084
  %1086 = vrot.lane.b32.xlu0 %v565, 15
  %v1087 = vpop.permute.xlu0 %1086
  %1088 = vrot.lane.b32.xlu0 %v569, 15
  %v1089 = vpop.permute.xlu0 %1088
  %1090 = vrot.lane.b32.xlu0 %v573, 15
  %v1091 = vpop.permute.xlu0 %1090
  %1092 = vrot.lane.b32.xlu0 %v577, 15
  %v1093 = vpop.permute.xlu0 %1092
  %1094 = vrot.lane.b32.xlu0 %v581, 15
  %v1095 = vpop.permute.xlu0 %1094
  %vm1096 = vcmp.lt.s32.totalorder %v604, 15
  %v1097 = vsel %vm1096, %v1073, %v1085
  %v1098 = vsel %vm1096, %v1075, %v1087
  %v1099 = vsel %vm1096, %v1077, %v1089
  %v1100 = vsel %vm1096, %v1079, %v1091
  %v1101 = vsel %vm1096, %v1081, %v1093
  %v1102 = vsel %vm1096, %v1083, %v1095
  %v1103 = vsel %vm1096, %v1061, %v1073
  %v1104 = vsel %vm1096, %v1063, %v1075
  %v1105 = vsel %vm1096, %v1065, %v1077
  %v1106 = vsel %vm1096, %v1067, %v1079
  %v1107 = vsel %vm1096, %v1069, %v1081
  %v1108 = vsel %vm1096, %v1071, %v1083
  %v1109 = vsel %vm1096, %v1049, %v1061
  %v1110 = vsel %vm1096, %v1051, %v1063
  %v1111 = vsel %vm1096, %v1053, %v1065
  %v1112 = vsel %vm1096, %v1055, %v1067
  %v1113 = vsel %vm1096, %v1057, %v1069
  %v1114 = vsel %vm1096, %v1059, %v1071
  %v1115 = vsel %vm1096, %v1085, %v1049
  %v1116 = vsel %vm1096, %v1087, %v1051
  %v1117 = vsel %vm1096, %v1089, %v1053
  %v1118 = vsel %vm1096, %v1091, %v1055
  %v1119 = vsel %vm1096, %v1093, %v1057
  %v1120 = vsel %vm1096, %v1095, %v1059
  %1121 = vset.pattern.permute.xlu0 2
  %1122 = vperm.xlu0 %1121, %v582
  %v1123 = vpop.permute.xlu0 %1122
  %1125 = vset.pattern.permute.xlu0 2
  %1126 = vperm.xlu0 %1125, %v583
  %v1127 = vpop.permute.xlu0 %1126
  %1129 = vset.pattern.permute.xlu0 2
  %1130 = vperm.xlu0 %1129, %v584
  %v1131 = vpop.permute.xlu0 %1130
  %1133 = vset.pattern.permute.xlu0 2
  %1134 = vperm.xlu0 %1133, %v585
  %v1135 = vpop.permute.xlu0 %1134
  %1137 = vset.pattern.permute.xlu0 2
  %1138 = vperm.xlu0 %1137, %v586
  %v1139 = vpop.permute.xlu0 %1138
  %1141 = vset.pattern.permute.xlu0 2
  %1142 = vperm.xlu0 %1141, %v587
  %v1143 = vpop.permute.xlu0 %1142
  %v1145 = vmul.f32 %v1115, %v1123
  %v1146 = vmul.f32 %v1109, %v1123
  %v1147 = vmul.f32 %v1103, %v1123
  %v1148 = vmul.f32 %v1097, %v1123
  %v1149 = vmul.f32 %v1116, %v1127
  %v1150 = vmul.f32 %v1110, %v1127
  %v1151 = vmul.f32 %v1104, %v1127
  %v1152 = vmul.f32 %v1098, %v1127
  %v1153 = vmul.f32 %v1117, %v1131
  %v1154 = vmul.f32 %v1111, %v1131
  %v1155 = vmul.f32 %v1105, %v1131
  %v1156 = vmul.f32 %v1099, %v1131
  %v1157 = vmul.f32 %v1118, %v1135
  %v1158 = vmul.f32 %v1112, %v1135
  %v1159 = vmul.f32 %v1106, %v1135
  %v1160 = vmul.f32 %v1100, %v1135
  %v1161 = vmul.f32 %v1119, %v1139
  %v1162 = vmul.f32 %v1113, %v1139
  %v1163 = vmul.f32 %v1107, %v1139
  %v1164 = vmul.f32 %v1101, %v1139
  %v1165 = vmul.f32 %v1120, %v1143
  %v1166 = vmul.f32 %v1114, %v1143
  %v1167 = vmul.f32 %v1108, %v1143
  %v1168 = vmul.f32 %v1102, %v1143
  %v1169 = vmul.f32 %v1145, %v748
  %v1170 = vmul.f32 %v1146, %v749
  %v1171 = vmul.f32 %v1147, %v750
  %v1172 = vmul.f32 %v1148, %v751
  %v1173 = vmul.f32 %v1149, %v748
  %v1174 = vmul.f32 %v1150, %v749
  %v1175 = vmul.f32 %v1151, %v750
  %v1176 = vmul.f32 %v1152, %v751
  %v1177 = vmul.f32 %v1153, %v748
  %v1178 = vmul.f32 %v1154, %v749
  %v1179 = vmul.f32 %v1155, %v750
  %v1180 = vmul.f32 %v1156, %v751
  %v1181 = vmul.f32 %v1157, %v748
  %v1182 = vmul.f32 %v1158, %v749
  %v1183 = vmul.f32 %v1159, %v750
  %v1184 = vmul.f32 %v1160, %v751
  %v1185 = vmul.f32 %v1161, %v748
  %v1186 = vmul.f32 %v1162, %v749
  %v1187 = vmul.f32 %v1163, %v750
  %v1188 = vmul.f32 %v1164, %v751
  %v1189 = vmul.f32 %v1165, %v748
  %v1190 = vmul.f32 %v1166, %v749
  %v1191 = vmul.f32 %v1167, %v750
  %v1192 = vmul.f32 %v1168, %v751
  %v1193 = vadd.f32 %v1024, %v1169
  %v1194 = vadd.f32 %v1025, %v1170
  %v1195 = vadd.f32 %v1026, %v1171
  %v1196 = vadd.f32 %v1027, %v1172
  %v1197 = vadd.f32 %v1028, %v1173
  %v1198 = vadd.f32 %v1029, %v1174
  %v1199 = vadd.f32 %v1030, %v1175
  %v1200 = vadd.f32 %v1031, %v1176
  %v1201 = vadd.f32 %v1032, %v1177
  %v1202 = vadd.f32 %v1033, %v1178
  %v1203 = vadd.f32 %v1034, %v1179
  %v1204 = vadd.f32 %v1035, %v1180
  %v1205 = vadd.f32 %v1036, %v1181
  %v1206 = vadd.f32 %v1037, %v1182
  %v1207 = vadd.f32 %v1038, %v1183
  %v1208 = vadd.f32 %v1039, %v1184
  %v1209 = vadd.f32 %v1040, %v1185
  %v1210 = vadd.f32 %v1041, %v1186
  %v1211 = vadd.f32 %v1042, %v1187
  %v1212 = vadd.f32 %v1043, %v1188
  %v1213 = vadd.f32 %v1044, %v1189
  %v1214 = vadd.f32 %v1045, %v1190
  %v1215 = vadd.f32 %v1046, %v1191
  %v1216 = vadd.f32 %v1047, %v1192
  %v1217 = vmul.f32 %v1193, %v712
  %v1218 = vmul.f32 %v1194, %v713
  %v1219 = vmul.f32 %v1195, %v714
  %v1220 = vmul.f32 %v1196, %v715
  %v1221 = vmul.f32 %v1197, %v712
  %v1222 = vmul.f32 %v1198, %v713
  %v1223 = vmul.f32 %v1199, %v714
  %v1224 = vmul.f32 %v1200, %v715
  %v1225 = vmul.f32 %v1201, %v712
  %v1226 = vmul.f32 %v1202, %v713
  %v1227 = vmul.f32 %v1203, %v714
  %v1228 = vmul.f32 %v1204, %v715
  %v1229 = vmul.f32 %v1205, %v712
  %v1230 = vmul.f32 %v1206, %v713
  %v1231 = vmul.f32 %v1207, %v714
  %v1232 = vmul.f32 %v1208, %v715
  %v1233 = vmul.f32 %v1209, %v712
  %v1234 = vmul.f32 %v1210, %v713
  %v1235 = vmul.f32 %v1211, %v714
  %v1236 = vmul.f32 %v1212, %v715
  %v1237 = vmul.f32 %v1213, %v712
  %v1238 = vmul.f32 %v1214, %v713
  %v1239 = vmul.f32 %v1215, %v714
  %v1240 = vmul.f32 %v1216, %v715
  %1241 = vrot.lane.b32.xlu0 %v558, 1
  %v1242 = vpop.permute.xlu0 %1241
  %1243 = vrot.lane.b32.xlu0 %v562, 1
  %v1244 = vpop.permute.xlu0 %1243
  %1245 = vrot.lane.b32.xlu0 %v566, 1
  %v1246 = vpop.permute.xlu0 %1245
  %1247 = vrot.lane.b32.xlu0 %v570, 1
  %v1248 = vpop.permute.xlu0 %1247
  %1249 = vrot.lane.b32.xlu0 %v574, 1
  %v1250 = vpop.permute.xlu0 %1249
  %1251 = vrot.lane.b32.xlu0 %v578, 1
  %v1252 = vpop.permute.xlu0 %1251
  %1253 = vrot.lane.b32.xlu0 %v559, 1
  %v1254 = vpop.permute.xlu0 %1253
  %1255 = vrot.lane.b32.xlu0 %v563, 1
  %v1256 = vpop.permute.xlu0 %1255
  %1257 = vrot.lane.b32.xlu0 %v567, 1
  %v1258 = vpop.permute.xlu0 %1257
  %1259 = vrot.lane.b32.xlu0 %v571, 1
  %v1260 = vpop.permute.xlu0 %1259
  %1261 = vrot.lane.b32.xlu0 %v575, 1
  %v1262 = vpop.permute.xlu0 %1261
  %1263 = vrot.lane.b32.xlu0 %v579, 1
  %v1264 = vpop.permute.xlu0 %1263
  %1265 = vrot.lane.b32.xlu0 %v560, 1
  %v1266 = vpop.permute.xlu0 %1265
  %1267 = vrot.lane.b32.xlu0 %v564, 1
  %v1268 = vpop.permute.xlu0 %1267
  %1269 = vrot.lane.b32.xlu0 %v568, 1
  %v1270 = vpop.permute.xlu0 %1269
  %1271 = vrot.lane.b32.xlu0 %v572, 1
  %v1272 = vpop.permute.xlu0 %1271
  %1273 = vrot.lane.b32.xlu0 %v576, 1
  %v1274 = vpop.permute.xlu0 %1273
  %1275 = vrot.lane.b32.xlu0 %v580, 1
  %v1276 = vpop.permute.xlu0 %1275
  %1277 = vrot.lane.b32.xlu0 %v561, 1
  %v1278 = vpop.permute.xlu0 %1277
  %1279 = vrot.lane.b32.xlu0 %v565, 1
  %v1280 = vpop.permute.xlu0 %1279
  %1281 = vrot.lane.b32.xlu0 %v569, 1
  %v1282 = vpop.permute.xlu0 %1281
  %1283 = vrot.lane.b32.xlu0 %v573, 1
  %v1284 = vpop.permute.xlu0 %1283
  %1285 = vrot.lane.b32.xlu0 %v577, 1
  %v1286 = vpop.permute.xlu0 %1285
  %1287 = vrot.lane.b32.xlu0 %v581, 1
  %v1288 = vpop.permute.xlu0 %1287
  %vm1289 = vcmp.lt.s32.totalorder %v604, 1
  %v1290 = vsel %vm1289, %v1266, %v1278
  %v1291 = vsel %vm1289, %v1268, %v1280
  %v1292 = vsel %vm1289, %v1270, %v1282
  %v1293 = vsel %vm1289, %v1272, %v1284
  %v1294 = vsel %vm1289, %v1274, %v1286
  %v1295 = vsel %vm1289, %v1276, %v1288
  %v1296 = vsel %vm1289, %v1254, %v1266
  %v1297 = vsel %vm1289, %v1256, %v1268
  %v1298 = vsel %vm1289, %v1258, %v1270
  %v1299 = vsel %vm1289, %v1260, %v1272
  %v1300 = vsel %vm1289, %v1262, %v1274
  %v1301 = vsel %vm1289, %v1264, %v1276
  %v1302 = vsel %vm1289, %v1242, %v1254
  %v1303 = vsel %vm1289, %v1244, %v1256
  %v1304 = vsel %vm1289, %v1246, %v1258
  %v1305 = vsel %vm1289, %v1248, %v1260
  %v1306 = vsel %vm1289, %v1250, %v1262
  %v1307 = vsel %vm1289, %v1252, %v1264
  %v1308 = vsel %vm1289, %v1278, %v1242
  %v1309 = vsel %vm1289, %v1280, %v1244
  %v1310 = vsel %vm1289, %v1282, %v1246
  %v1311 = vsel %vm1289, %v1284, %v1248
  %v1312 = vsel %vm1289, %v1286, %v1250
  %v1313 = vsel %vm1289, %v1288, %v1252
  %1314 = vset.pattern.permute.xlu0 3
  %1315 = vperm.xlu0 %1314, %v582
  %v1316 = vpop.permute.xlu0 %1315
  %1318 = vset.pattern.permute.xlu0 3
  %1319 = vperm.xlu0 %1318, %v583
  %v1320 = vpop.permute.xlu0 %1319
  %1322 = vset.pattern.permute.xlu0 3
  %1323 = vperm.xlu0 %1322, %v584
  %v1324 = vpop.permute.xlu0 %1323
  %1326 = vset.pattern.permute.xlu0 3
  %1327 = vperm.xlu0 %1326, %v585
  %v1328 = vpop.permute.xlu0 %1327
  %1330 = vset.pattern.permute.xlu0 3
  %1331 = vperm.xlu0 %1330, %v586
  %v1332 = vpop.permute.xlu0 %1331
  %1334 = vset.pattern.permute.xlu0 3
  %1335 = vperm.xlu0 %1334, %v587
  %v1336 = vpop.permute.xlu0 %1335
  %v1338 = vmul.f32 %v1308, %v1316
  %v1339 = vmul.f32 %v1302, %v1316
  %v1340 = vmul.f32 %v1296, %v1316
  %v1341 = vmul.f32 %v1290, %v1316
  %v1342 = vmul.f32 %v1309, %v1320
  %v1343 = vmul.f32 %v1303, %v1320
  %v1344 = vmul.f32 %v1297, %v1320
  %v1345 = vmul.f32 %v1291, %v1320
  %v1346 = vmul.f32 %v1310, %v1324
  %v1347 = vmul.f32 %v1304, %v1324
  %v1348 = vmul.f32 %v1298, %v1324
  %v1349 = vmul.f32 %v1292, %v1324
  %v1350 = vmul.f32 %v1311, %v1328
  %v1351 = vmul.f32 %v1305, %v1328
  %v1352 = vmul.f32 %v1299, %v1328
  %v1353 = vmul.f32 %v1293, %v1328
  %v1354 = vmul.f32 %v1312, %v1332
  %v1355 = vmul.f32 %v1306, %v1332
  %v1356 = vmul.f32 %v1300, %v1332
  %v1357 = vmul.f32 %v1294, %v1332
  %v1358 = vmul.f32 %v1313, %v1336
  %v1359 = vmul.f32 %v1307, %v1336
  %v1360 = vmul.f32 %v1301, %v1336
  %v1361 = vmul.f32 %v1295, %v1336
  %v1362 = vmul.f32 %v1338, %v736
  %v1363 = vmul.f32 %v1339, %v737
  %v1364 = vmul.f32 %v1340, %v738
  %v1365 = vmul.f32 %v1341, %v739
  %v1366 = vmul.f32 %v1342, %v736
  %v1367 = vmul.f32 %v1343, %v737
  %v1368 = vmul.f32 %v1344, %v738
  %v1369 = vmul.f32 %v1345, %v739
  %v1370 = vmul.f32 %v1346, %v736
  %v1371 = vmul.f32 %v1347, %v737
  %v1372 = vmul.f32 %v1348, %v738
  %v1373 = vmul.f32 %v1349, %v739
  %v1374 = vmul.f32 %v1350, %v736
  %v1375 = vmul.f32 %v1351, %v737
  %v1376 = vmul.f32 %v1352, %v738
  %v1377 = vmul.f32 %v1353, %v739
  %v1378 = vmul.f32 %v1354, %v736
  %v1379 = vmul.f32 %v1355, %v737
  %v1380 = vmul.f32 %v1356, %v738
  %v1381 = vmul.f32 %v1357, %v739
  %v1382 = vmul.f32 %v1358, %v736
  %v1383 = vmul.f32 %v1359, %v737
  %v1384 = vmul.f32 %v1360, %v738
  %v1385 = vmul.f32 %v1361, %v739
  %1386 = vset.pattern.permute.xlu0 4
  %1387 = vperm.xlu0 %1386, %v582
  %v1388 = vpop.permute.xlu0 %1387
  %1390 = vset.pattern.permute.xlu0 4
  %1391 = vperm.xlu0 %1390, %v583
  %v1392 = vpop.permute.xlu0 %1391
  %1394 = vset.pattern.permute.xlu0 4
  %1395 = vperm.xlu0 %1394, %v584
  %v1396 = vpop.permute.xlu0 %1395
  %1398 = vset.pattern.permute.xlu0 4
  %1399 = vperm.xlu0 %1398, %v585
  %v1400 = vpop.permute.xlu0 %1399
  %1402 = vset.pattern.permute.xlu0 4
  %1403 = vperm.xlu0 %1402, %v586
  %v1404 = vpop.permute.xlu0 %1403
  %1406 = vset.pattern.permute.xlu0 4
  %1407 = vperm.xlu0 %1406, %v587
  %v1408 = vpop.permute.xlu0 %1407
  %v1410 = vmul.f32 %v558, %v1388
  %v1411 = vmul.f32 %v559, %v1388
  %v1412 = vmul.f32 %v560, %v1388
  %v1413 = vmul.f32 %v561, %v1388
  %v1414 = vmul.f32 %v562, %v1392
  %v1415 = vmul.f32 %v563, %v1392
  %v1416 = vmul.f32 %v564, %v1392
  %v1417 = vmul.f32 %v565, %v1392
  %v1418 = vmul.f32 %v566, %v1396
  %v1419 = vmul.f32 %v567, %v1396
  %v1420 = vmul.f32 %v568, %v1396
  %v1421 = vmul.f32 %v569, %v1396
  %v1422 = vmul.f32 %v570, %v1400
  %v1423 = vmul.f32 %v571, %v1400
  %v1424 = vmul.f32 %v572, %v1400
  %v1425 = vmul.f32 %v573, %v1400
  %v1426 = vmul.f32 %v574, %v1404
  %v1427 = vmul.f32 %v575, %v1404
  %v1428 = vmul.f32 %v576, %v1404
  %v1429 = vmul.f32 %v577, %v1404
  %v1430 = vmul.f32 %v578, %v1408
  %v1431 = vmul.f32 %v579, %v1408
  %v1432 = vmul.f32 %v580, %v1408
  %v1433 = vmul.f32 %v581, %v1408
  %v1434 = vadd.f32 %v1362, %v1410
  %v1435 = vadd.f32 %v1363, %v1411
  %v1436 = vadd.f32 %v1364, %v1412
  %v1437 = vadd.f32 %v1365, %v1413
  %v1438 = vadd.f32 %v1366, %v1414
  %v1439 = vadd.f32 %v1367, %v1415
  %v1440 = vadd.f32 %v1368, %v1416
  %v1441 = vadd.f32 %v1369, %v1417
  %v1442 = vadd.f32 %v1370, %v1418
  %v1443 = vadd.f32 %v1371, %v1419
  %v1444 = vadd.f32 %v1372, %v1420
  %v1445 = vadd.f32 %v1373, %v1421
  %v1446 = vadd.f32 %v1374, %v1422
  %v1447 = vadd.f32 %v1375, %v1423
  %v1448 = vadd.f32 %v1376, %v1424
  %v1449 = vadd.f32 %v1377, %v1425
  %v1450 = vadd.f32 %v1378, %v1426
  %v1451 = vadd.f32 %v1379, %v1427
  %v1452 = vadd.f32 %v1380, %v1428
  %v1453 = vadd.f32 %v1381, %v1429
  %v1454 = vadd.f32 %v1382, %v1430
  %v1455 = vadd.f32 %v1383, %v1431
  %v1456 = vadd.f32 %v1384, %v1432
  %v1457 = vadd.f32 %v1385, %v1433
  %1458 = vrot.lane.b32.xlu0 %v558, 127
  %v1459 = vpop.permute.xlu0 %1458
  %1460 = vrot.lane.b32.xlu0 %v562, 127
  %v1461 = vpop.permute.xlu0 %1460
  %1462 = vrot.lane.b32.xlu0 %v566, 127
  %v1463 = vpop.permute.xlu0 %1462
  %1464 = vrot.lane.b32.xlu0 %v570, 127
  %v1465 = vpop.permute.xlu0 %1464
  %1466 = vrot.lane.b32.xlu0 %v574, 127
  %v1467 = vpop.permute.xlu0 %1466
  %1468 = vrot.lane.b32.xlu0 %v578, 127
  %v1469 = vpop.permute.xlu0 %1468
  %1470 = vrot.lane.b32.xlu0 %v559, 127
  %v1471 = vpop.permute.xlu0 %1470
  %1472 = vrot.lane.b32.xlu0 %v563, 127
  %v1473 = vpop.permute.xlu0 %1472
  %1474 = vrot.lane.b32.xlu0 %v567, 127
  %v1475 = vpop.permute.xlu0 %1474
  %1476 = vrot.lane.b32.xlu0 %v571, 127
  %v1477 = vpop.permute.xlu0 %1476
  %1478 = vrot.lane.b32.xlu0 %v575, 127
  %v1479 = vpop.permute.xlu0 %1478
  %1480 = vrot.lane.b32.xlu0 %v579, 127
  %v1481 = vpop.permute.xlu0 %1480
  %1482 = vrot.lane.b32.xlu0 %v560, 127
  %v1483 = vpop.permute.xlu0 %1482
  %1484 = vrot.lane.b32.xlu0 %v564, 127
  %v1485 = vpop.permute.xlu0 %1484
  %1486 = vrot.lane.b32.xlu0 %v568, 127
  %v1487 = vpop.permute.xlu0 %1486
  %1488 = vrot.lane.b32.xlu0 %v572, 127
  %v1489 = vpop.permute.xlu0 %1488
  %1490 = vrot.lane.b32.xlu0 %v576, 127
  %v1491 = vpop.permute.xlu0 %1490
  %1492 = vrot.lane.b32.xlu0 %v580, 127
  %v1493 = vpop.permute.xlu0 %1492
  %1494 = vrot.lane.b32.xlu0 %v561, 127
  %v1495 = vpop.permute.xlu0 %1494
  %1496 = vrot.lane.b32.xlu0 %v565, 127
  %v1497 = vpop.permute.xlu0 %1496
  %1498 = vrot.lane.b32.xlu0 %v569, 127
  %v1499 = vpop.permute.xlu0 %1498
  %1500 = vrot.lane.b32.xlu0 %v573, 127
  %v1501 = vpop.permute.xlu0 %1500
  %1502 = vrot.lane.b32.xlu0 %v577, 127
  %v1503 = vpop.permute.xlu0 %1502
  %1504 = vrot.lane.b32.xlu0 %v581, 127
  %v1505 = vpop.permute.xlu0 %1504
  %vm1506 = vcmp.lt.s32.totalorder %v604, 127
  %v1507 = vsel %vm1506, %v1483, %v1495
  %v1508 = vsel %vm1506, %v1485, %v1497
  %v1509 = vsel %vm1506, %v1487, %v1499
  %v1510 = vsel %vm1506, %v1489, %v1501
  %v1511 = vsel %vm1506, %v1491, %v1503
  %v1512 = vsel %vm1506, %v1493, %v1505
  %v1513 = vsel %vm1506, %v1471, %v1483
  %v1514 = vsel %vm1506, %v1473, %v1485
  %v1515 = vsel %vm1506, %v1475, %v1487
  %v1516 = vsel %vm1506, %v1477, %v1489
  %v1517 = vsel %vm1506, %v1479, %v1491
  %v1518 = vsel %vm1506, %v1481, %v1493
  %v1519 = vsel %vm1506, %v1459, %v1471
  %v1520 = vsel %vm1506, %v1461, %v1473
  %v1521 = vsel %vm1506, %v1463, %v1475
  %v1522 = vsel %vm1506, %v1465, %v1477
  %v1523 = vsel %vm1506, %v1467, %v1479
  %v1524 = vsel %vm1506, %v1469, %v1481
  %v1525 = vsel %vm1506, %v1495, %v1459
  %v1526 = vsel %vm1506, %v1497, %v1461
  %v1527 = vsel %vm1506, %v1499, %v1463
  %v1528 = vsel %vm1506, %v1501, %v1465
  %v1529 = vsel %vm1506, %v1503, %v1467
  %v1530 = vsel %vm1506, %v1505, %v1469
  %1531 = vset.pattern.permute.xlu0 5
  %1532 = vperm.xlu0 %1531, %v582
  %v1533 = vpop.permute.xlu0 %1532
  %1535 = vset.pattern.permute.xlu0 5
  %1536 = vperm.xlu0 %1535, %v583
  %v1537 = vpop.permute.xlu0 %1536
  %1539 = vset.pattern.permute.xlu0 5
  %1540 = vperm.xlu0 %1539, %v584
  %v1541 = vpop.permute.xlu0 %1540
  %1543 = vset.pattern.permute.xlu0 5
  %1544 = vperm.xlu0 %1543, %v585
  %v1545 = vpop.permute.xlu0 %1544
  %1547 = vset.pattern.permute.xlu0 5
  %1548 = vperm.xlu0 %1547, %v586
  %v1549 = vpop.permute.xlu0 %1548
  %1551 = vset.pattern.permute.xlu0 5
  %1552 = vperm.xlu0 %1551, %v587
  %v1553 = vpop.permute.xlu0 %1552
  %v1555 = vmul.f32 %v1519, %v1533
  %v1556 = vmul.f32 %v1513, %v1533
  %v1557 = vmul.f32 %v1507, %v1533
  %v1558 = vmul.f32 %v1525, %v1533
  %v1559 = vmul.f32 %v1520, %v1537
  %v1560 = vmul.f32 %v1514, %v1537
  %v1561 = vmul.f32 %v1508, %v1537
  %v1562 = vmul.f32 %v1526, %v1537
  %v1563 = vmul.f32 %v1521, %v1541
  %v1564 = vmul.f32 %v1515, %v1541
  %v1565 = vmul.f32 %v1509, %v1541
  %v1566 = vmul.f32 %v1527, %v1541
  %v1567 = vmul.f32 %v1522, %v1545
  %v1568 = vmul.f32 %v1516, %v1545
  %v1569 = vmul.f32 %v1510, %v1545
  %v1570 = vmul.f32 %v1528, %v1545
  %v1571 = vmul.f32 %v1523, %v1549
  %v1572 = vmul.f32 %v1517, %v1549
  %v1573 = vmul.f32 %v1511, %v1549
  %v1574 = vmul.f32 %v1529, %v1549
  %v1575 = vmul.f32 %v1524, %v1553
  %v1576 = vmul.f32 %v1518, %v1553
  %v1577 = vmul.f32 %v1512, %v1553
  %v1578 = vmul.f32 %v1530, %v1553
  %v1579 = vmul.f32 %v1555, %v748
  %v1580 = vmul.f32 %v1556, %v749
  %v1581 = vmul.f32 %v1557, %v750
  %v1582 = vmul.f32 %v1558, %v751
  %v1583 = vmul.f32 %v1559, %v748
  %v1584 = vmul.f32 %v1560, %v749
  %v1585 = vmul.f32 %v1561, %v750
  %v1586 = vmul.f32 %v1562, %v751
  %v1587 = vmul.f32 %v1563, %v748
  %v1588 = vmul.f32 %v1564, %v749
  %v1589 = vmul.f32 %v1565, %v750
  %v1590 = vmul.f32 %v1566, %v751
  %v1591 = vmul.f32 %v1567, %v748
  %v1592 = vmul.f32 %v1568, %v749
  %v1593 = vmul.f32 %v1569, %v750
  %v1594 = vmul.f32 %v1570, %v751
  %v1595 = vmul.f32 %v1571, %v748
  %v1596 = vmul.f32 %v1572, %v749
  %v1597 = vmul.f32 %v1573, %v750
  %v1598 = vmul.f32 %v1574, %v751
  %v1599 = vmul.f32 %v1575, %v748
  %v1600 = vmul.f32 %v1576, %v749
  %v1601 = vmul.f32 %v1577, %v750
  %v1602 = vmul.f32 %v1578, %v751
  %v1603 = vadd.f32 %v1434, %v1579
  %v1604 = vadd.f32 %v1435, %v1580
  %v1605 = vadd.f32 %v1436, %v1581
  %v1606 = vadd.f32 %v1437, %v1582
  %v1607 = vadd.f32 %v1438, %v1583
  %v1608 = vadd.f32 %v1439, %v1584
  %v1609 = vadd.f32 %v1440, %v1585
  %v1610 = vadd.f32 %v1441, %v1586
  %v1611 = vadd.f32 %v1442, %v1587
  %v1612 = vadd.f32 %v1443, %v1588
  %v1613 = vadd.f32 %v1444, %v1589
  %v1614 = vadd.f32 %v1445, %v1590
  %v1615 = vadd.f32 %v1446, %v1591
  %v1616 = vadd.f32 %v1447, %v1592
  %v1617 = vadd.f32 %v1448, %v1593
  %v1618 = vadd.f32 %v1449, %v1594
  %v1619 = vadd.f32 %v1450, %v1595
  %v1620 = vadd.f32 %v1451, %v1596
  %v1621 = vadd.f32 %v1452, %v1597
  %v1622 = vadd.f32 %v1453, %v1598
  %v1623 = vadd.f32 %v1454, %v1599
  %v1624 = vadd.f32 %v1455, %v1600
  %v1625 = vadd.f32 %v1456, %v1601
  %v1626 = vadd.f32 %v1457, %v1602
  %v1627 = vadd.f32 %v1217, %v1603
  %v1628 = vadd.f32 %v1218, %v1604
  %v1629 = vadd.f32 %v1219, %v1605
  %v1630 = vadd.f32 %v1220, %v1606
  %v1631 = vadd.f32 %v1221, %v1607
  %v1632 = vadd.f32 %v1222, %v1608
  %v1633 = vadd.f32 %v1223, %v1609
  %v1634 = vadd.f32 %v1224, %v1610
  %v1635 = vadd.f32 %v1225, %v1611
  %v1636 = vadd.f32 %v1226, %v1612
  %v1637 = vadd.f32 %v1227, %v1613
  %v1638 = vadd.f32 %v1228, %v1614
  %v1639 = vadd.f32 %v1229, %v1615
  %v1640 = vadd.f32 %v1230, %v1616
  %v1641 = vadd.f32 %v1231, %v1617
  %v1642 = vadd.f32 %v1232, %v1618
  %v1643 = vadd.f32 %v1233, %v1619
  %v1644 = vadd.f32 %v1234, %v1620
  %v1645 = vadd.f32 %v1235, %v1621
  %v1646 = vadd.f32 %v1236, %v1622
  %v1647 = vadd.f32 %v1237, %v1623
  %v1648 = vadd.f32 %v1238, %v1624
  %v1649 = vadd.f32 %v1239, %v1625
  %v1650 = vadd.f32 %v1240, %v1626
  %1651 = vrot.lane.b32.xlu0 %v558, 113
  %v1652 = vpop.permute.xlu0 %1651
  %1653 = vrot.lane.b32.xlu0 %v562, 113
  %v1654 = vpop.permute.xlu0 %1653
  %1655 = vrot.lane.b32.xlu0 %v566, 113
  %v1656 = vpop.permute.xlu0 %1655
  %1657 = vrot.lane.b32.xlu0 %v570, 113
  %v1658 = vpop.permute.xlu0 %1657
  %1659 = vrot.lane.b32.xlu0 %v574, 113
  %v1660 = vpop.permute.xlu0 %1659
  %1661 = vrot.lane.b32.xlu0 %v578, 113
  %v1662 = vpop.permute.xlu0 %1661
  %1663 = vrot.lane.b32.xlu0 %v559, 113
  %v1664 = vpop.permute.xlu0 %1663
  %1665 = vrot.lane.b32.xlu0 %v563, 113
  %v1666 = vpop.permute.xlu0 %1665
  %1667 = vrot.lane.b32.xlu0 %v567, 113
  %v1668 = vpop.permute.xlu0 %1667
  %1669 = vrot.lane.b32.xlu0 %v571, 113
  %v1670 = vpop.permute.xlu0 %1669
  %1671 = vrot.lane.b32.xlu0 %v575, 113
  %v1672 = vpop.permute.xlu0 %1671
  %1673 = vrot.lane.b32.xlu0 %v579, 113
  %v1674 = vpop.permute.xlu0 %1673
  %1675 = vrot.lane.b32.xlu0 %v560, 113
  %v1676 = vpop.permute.xlu0 %1675
  %1677 = vrot.lane.b32.xlu0 %v564, 113
  %v1678 = vpop.permute.xlu0 %1677
  %1679 = vrot.lane.b32.xlu0 %v568, 113
  %v1680 = vpop.permute.xlu0 %1679
  %1681 = vrot.lane.b32.xlu0 %v572, 113
  %v1682 = vpop.permute.xlu0 %1681
  %1683 = vrot.lane.b32.xlu0 %v576, 113
  %v1684 = vpop.permute.xlu0 %1683
  %1685 = vrot.lane.b32.xlu0 %v580, 113
  %v1686 = vpop.permute.xlu0 %1685
  %1687 = vrot.lane.b32.xlu0 %v561, 113
  %v1688 = vpop.permute.xlu0 %1687
  %1689 = vrot.lane.b32.xlu0 %v565, 113
  %v1690 = vpop.permute.xlu0 %1689
  %1691 = vrot.lane.b32.xlu0 %v569, 113
  %v1692 = vpop.permute.xlu0 %1691
  %1693 = vrot.lane.b32.xlu0 %v573, 113
  %v1694 = vpop.permute.xlu0 %1693
  %1695 = vrot.lane.b32.xlu0 %v577, 113
  %v1696 = vpop.permute.xlu0 %1695
  %1697 = vrot.lane.b32.xlu0 %v581, 113
  %v1698 = vpop.permute.xlu0 %1697
  %vm1699 = vcmp.lt.s32.totalorder %v604, 113
  %v1700 = vsel %vm1699, %v1676, %v1688
  %v1701 = vsel %vm1699, %v1678, %v1690
  %v1702 = vsel %vm1699, %v1680, %v1692
  %v1703 = vsel %vm1699, %v1682, %v1694
  %v1704 = vsel %vm1699, %v1684, %v1696
  %v1705 = vsel %vm1699, %v1686, %v1698
  %v1706 = vsel %vm1699, %v1664, %v1676
  %v1707 = vsel %vm1699, %v1666, %v1678
  %v1708 = vsel %vm1699, %v1668, %v1680
  %v1709 = vsel %vm1699, %v1670, %v1682
  %v1710 = vsel %vm1699, %v1672, %v1684
  %v1711 = vsel %vm1699, %v1674, %v1686
  %v1712 = vsel %vm1699, %v1652, %v1664
  %v1713 = vsel %vm1699, %v1654, %v1666
  %v1714 = vsel %vm1699, %v1656, %v1668
  %v1715 = vsel %vm1699, %v1658, %v1670
  %v1716 = vsel %vm1699, %v1660, %v1672
  %v1717 = vsel %vm1699, %v1662, %v1674
  %v1718 = vsel %vm1699, %v1688, %v1652
  %v1719 = vsel %vm1699, %v1690, %v1654
  %v1720 = vsel %vm1699, %v1692, %v1656
  %v1721 = vsel %vm1699, %v1694, %v1658
  %v1722 = vsel %vm1699, %v1696, %v1660
  %v1723 = vsel %vm1699, %v1698, %v1662
  %1724 = vset.pattern.permute.xlu0 6
  %1725 = vperm.xlu0 %1724, %v582
  %v1726 = vpop.permute.xlu0 %1725
  %1728 = vset.pattern.permute.xlu0 6
  %1729 = vperm.xlu0 %1728, %v583
  %v1730 = vpop.permute.xlu0 %1729
  %1732 = vset.pattern.permute.xlu0 6
  %1733 = vperm.xlu0 %1732, %v584
  %v1734 = vpop.permute.xlu0 %1733
  %1736 = vset.pattern.permute.xlu0 6
  %1737 = vperm.xlu0 %1736, %v585
  %v1738 = vpop.permute.xlu0 %1737
  %1740 = vset.pattern.permute.xlu0 6
  %1741 = vperm.xlu0 %1740, %v586
  %v1742 = vpop.permute.xlu0 %1741
  %1744 = vset.pattern.permute.xlu0 6
  %1745 = vperm.xlu0 %1744, %v587
  %v1746 = vpop.permute.xlu0 %1745
  %v1748 = vmul.f32 %v1712, %v1726
  %v1749 = vmul.f32 %v1706, %v1726
  %v1750 = vmul.f32 %v1700, %v1726
  %v1751 = vmul.f32 %v1718, %v1726
  %v1752 = vmul.f32 %v1713, %v1730
  %v1753 = vmul.f32 %v1707, %v1730
  %v1754 = vmul.f32 %v1701, %v1730
  %v1755 = vmul.f32 %v1719, %v1730
  %v1756 = vmul.f32 %v1714, %v1734
  %v1757 = vmul.f32 %v1708, %v1734
  %v1758 = vmul.f32 %v1702, %v1734
  %v1759 = vmul.f32 %v1720, %v1734
  %v1760 = vmul.f32 %v1715, %v1738
  %v1761 = vmul.f32 %v1709, %v1738
  %v1762 = vmul.f32 %v1703, %v1738
  %v1763 = vmul.f32 %v1721, %v1738
  %v1764 = vmul.f32 %v1716, %v1742
  %v1765 = vmul.f32 %v1710, %v1742
  %v1766 = vmul.f32 %v1704, %v1742
  %v1767 = vmul.f32 %v1722, %v1742
  %v1768 = vmul.f32 %v1717, %v1746
  %v1769 = vmul.f32 %v1711, %v1746
  %v1770 = vmul.f32 %v1705, %v1746
  %v1771 = vmul.f32 %v1723, %v1746
  %v1772 = vmul.f32 %v1748, %v736
  %v1773 = vmul.f32 %v1749, %v737
  %v1774 = vmul.f32 %v1750, %v738
  %v1775 = vmul.f32 %v1751, %v739
  %v1776 = vmul.f32 %v1752, %v736
  %v1777 = vmul.f32 %v1753, %v737
  %v1778 = vmul.f32 %v1754, %v738
  %v1779 = vmul.f32 %v1755, %v739
  %v1780 = vmul.f32 %v1756, %v736
  %v1781 = vmul.f32 %v1757, %v737
  %v1782 = vmul.f32 %v1758, %v738
  %v1783 = vmul.f32 %v1759, %v739
  %v1784 = vmul.f32 %v1760, %v736
  %v1785 = vmul.f32 %v1761, %v737
  %v1786 = vmul.f32 %v1762, %v738
  %v1787 = vmul.f32 %v1763, %v739
  %v1788 = vmul.f32 %v1764, %v736
  %v1789 = vmul.f32 %v1765, %v737
  %v1790 = vmul.f32 %v1766, %v738
  %v1791 = vmul.f32 %v1767, %v739
  %v1792 = vmul.f32 %v1768, %v736
  %v1793 = vmul.f32 %v1769, %v737
  %v1794 = vmul.f32 %v1770, %v738
  %v1795 = vmul.f32 %v1771, %v739
  %1796 = vrot.lane.b32.xlu0 %v558, 112
  %v1797 = vpop.permute.xlu0 %1796
  %1798 = vrot.lane.b32.xlu0 %v562, 112
  %v1799 = vpop.permute.xlu0 %1798
  %1800 = vrot.lane.b32.xlu0 %v566, 112
  %v1801 = vpop.permute.xlu0 %1800
  %1802 = vrot.lane.b32.xlu0 %v570, 112
  %v1803 = vpop.permute.xlu0 %1802
  %1804 = vrot.lane.b32.xlu0 %v574, 112
  %v1805 = vpop.permute.xlu0 %1804
  %1806 = vrot.lane.b32.xlu0 %v578, 112
  %v1807 = vpop.permute.xlu0 %1806
  %1808 = vrot.lane.b32.xlu0 %v559, 112
  %v1809 = vpop.permute.xlu0 %1808
  %1810 = vrot.lane.b32.xlu0 %v563, 112
  %v1811 = vpop.permute.xlu0 %1810
  %1812 = vrot.lane.b32.xlu0 %v567, 112
  %v1813 = vpop.permute.xlu0 %1812
  %1814 = vrot.lane.b32.xlu0 %v571, 112
  %v1815 = vpop.permute.xlu0 %1814
  %1816 = vrot.lane.b32.xlu0 %v575, 112
  %v1817 = vpop.permute.xlu0 %1816
  %1818 = vrot.lane.b32.xlu0 %v579, 112
  %v1819 = vpop.permute.xlu0 %1818
  %1820 = vrot.lane.b32.xlu0 %v560, 112
  %v1821 = vpop.permute.xlu0 %1820
  %1822 = vrot.lane.b32.xlu0 %v564, 112
  %v1823 = vpop.permute.xlu0 %1822
  %1824 = vrot.lane.b32.xlu0 %v568, 112
  %v1825 = vpop.permute.xlu0 %1824
  %1826 = vrot.lane.b32.xlu0 %v572, 112
  %v1827 = vpop.permute.xlu0 %1826
  %1828 = vrot.lane.b32.xlu0 %v576, 112
  %v1829 = vpop.permute.xlu0 %1828
  %1830 = vrot.lane.b32.xlu0 %v580, 112
  %v1831 = vpop.permute.xlu0 %1830
  %1832 = vrot.lane.b32.xlu0 %v561, 112
  %v1833 = vpop.permute.xlu0 %1832
  %1834 = vrot.lane.b32.xlu0 %v565, 112
  %v1835 = vpop.permute.xlu0 %1834
  %1836 = vrot.lane.b32.xlu0 %v569, 112
  %v1837 = vpop.permute.xlu0 %1836
  %1838 = vrot.lane.b32.xlu0 %v573, 112
  %v1839 = vpop.permute.xlu0 %1838
  %1840 = vrot.lane.b32.xlu0 %v577, 112
  %v1841 = vpop.permute.xlu0 %1840
  %1842 = vrot.lane.b32.xlu0 %v581, 112
  %v1843 = vpop.permute.xlu0 %1842
  %vm1844 = vcmp.lt.s32.totalorder %v604, 112
  %v1845 = vsel %vm1844, %v1821, %v1833
  %v1846 = vsel %vm1844, %v1823, %v1835
  %v1847 = vsel %vm1844, %v1825, %v1837
  %v1848 = vsel %vm1844, %v1827, %v1839
  %v1849 = vsel %vm1844, %v1829, %v1841
  %v1850 = vsel %vm1844, %v1831, %v1843
  %v1851 = vsel %vm1844, %v1809, %v1821
  %v1852 = vsel %vm1844, %v1811, %v1823
  %v1853 = vsel %vm1844, %v1813, %v1825
  %v1854 = vsel %vm1844, %v1815, %v1827
  %v1855 = vsel %vm1844, %v1817, %v1829
  %v1856 = vsel %vm1844, %v1819, %v1831
  %v1857 = vsel %vm1844, %v1797, %v1809
  %v1858 = vsel %vm1844, %v1799, %v1811
  %v1859 = vsel %vm1844, %v1801, %v1813
  %v1860 = vsel %vm1844, %v1803, %v1815
  %v1861 = vsel %vm1844, %v1805, %v1817
  %v1862 = vsel %vm1844, %v1807, %v1819
  %v1863 = vsel %vm1844, %v1833, %v1797
  %v1864 = vsel %vm1844, %v1835, %v1799
  %v1865 = vsel %vm1844, %v1837, %v1801
  %v1866 = vsel %vm1844, %v1839, %v1803
  %v1867 = vsel %vm1844, %v1841, %v1805
  %v1868 = vsel %vm1844, %v1843, %v1807
  %1869 = vset.pattern.permute.xlu0 7
  %1870 = vperm.xlu0 %1869, %v582
  %v1871 = vpop.permute.xlu0 %1870
  %1873 = vset.pattern.permute.xlu0 7
  %1874 = vperm.xlu0 %1873, %v583
  %v1875 = vpop.permute.xlu0 %1874
  %1877 = vset.pattern.permute.xlu0 7
  %1878 = vperm.xlu0 %1877, %v584
  %v1879 = vpop.permute.xlu0 %1878
  %1881 = vset.pattern.permute.xlu0 7
  %1882 = vperm.xlu0 %1881, %v585
  %v1883 = vpop.permute.xlu0 %1882
  %1885 = vset.pattern.permute.xlu0 7
  %1886 = vperm.xlu0 %1885, %v586
  %v1887 = vpop.permute.xlu0 %1886
  %1889 = vset.pattern.permute.xlu0 7
  %1890 = vperm.xlu0 %1889, %v587
  %v1891 = vpop.permute.xlu0 %1890
  %v1893 = vmul.f32 %v1857, %v1871
  %v1894 = vmul.f32 %v1851, %v1871
  %v1895 = vmul.f32 %v1845, %v1871
  %v1896 = vmul.f32 %v1863, %v1871
  %v1897 = vmul.f32 %v1858, %v1875
  %v1898 = vmul.f32 %v1852, %v1875
  %v1899 = vmul.f32 %v1846, %v1875
  %v1900 = vmul.f32 %v1864, %v1875
  %v1901 = vmul.f32 %v1859, %v1879
  %v1902 = vmul.f32 %v1853, %v1879
  %v1903 = vmul.f32 %v1847, %v1879
  %v1904 = vmul.f32 %v1865, %v1879
  %v1905 = vmul.f32 %v1860, %v1883
  %v1906 = vmul.f32 %v1854, %v1883
  %v1907 = vmul.f32 %v1848, %v1883
  %v1908 = vmul.f32 %v1866, %v1883
  %v1909 = vmul.f32 %v1861, %v1887
  %v1910 = vmul.f32 %v1855, %v1887
  %v1911 = vmul.f32 %v1849, %v1887
  %v1912 = vmul.f32 %v1867, %v1887
  %v1913 = vmul.f32 %v1862, %v1891
  %v1914 = vmul.f32 %v1856, %v1891
  %v1915 = vmul.f32 %v1850, %v1891
  %v1916 = vmul.f32 %v1868, %v1891
  %v1917 = vadd.f32 %v1772, %v1893
  %v1918 = vadd.f32 %v1773, %v1894
  %v1919 = vadd.f32 %v1774, %v1895
  %v1920 = vadd.f32 %v1775, %v1896
  %v1921 = vadd.f32 %v1776, %v1897
  %v1922 = vadd.f32 %v1777, %v1898
  %v1923 = vadd.f32 %v1778, %v1899
  %v1924 = vadd.f32 %v1779, %v1900
  %v1925 = vadd.f32 %v1780, %v1901
  %v1926 = vadd.f32 %v1781, %v1902
  %v1927 = vadd.f32 %v1782, %v1903
  %v1928 = vadd.f32 %v1783, %v1904
  %v1929 = vadd.f32 %v1784, %v1905
  %v1930 = vadd.f32 %v1785, %v1906
  %v1931 = vadd.f32 %v1786, %v1907
  %v1932 = vadd.f32 %v1787, %v1908
  %v1933 = vadd.f32 %v1788, %v1909
  %v1934 = vadd.f32 %v1789, %v1910
  %v1935 = vadd.f32 %v1790, %v1911
  %v1936 = vadd.f32 %v1791, %v1912
  %v1937 = vadd.f32 %v1792, %v1913
  %v1938 = vadd.f32 %v1793, %v1914
  %v1939 = vadd.f32 %v1794, %v1915
  %v1940 = vadd.f32 %v1795, %v1916
  %1941 = vrot.lane.b32.xlu0 %v558, 111
  %v1942 = vpop.permute.xlu0 %1941
  %1943 = vrot.lane.b32.xlu0 %v562, 111
  %v1944 = vpop.permute.xlu0 %1943
  %1945 = vrot.lane.b32.xlu0 %v566, 111
  %v1946 = vpop.permute.xlu0 %1945
  %1947 = vrot.lane.b32.xlu0 %v570, 111
  %v1948 = vpop.permute.xlu0 %1947
  %1949 = vrot.lane.b32.xlu0 %v574, 111
  %v1950 = vpop.permute.xlu0 %1949
  %1951 = vrot.lane.b32.xlu0 %v578, 111
  %v1952 = vpop.permute.xlu0 %1951
  %1953 = vrot.lane.b32.xlu0 %v559, 111
  %v1954 = vpop.permute.xlu0 %1953
  %1955 = vrot.lane.b32.xlu0 %v563, 111
  %v1956 = vpop.permute.xlu0 %1955
  %1957 = vrot.lane.b32.xlu0 %v567, 111
  %v1958 = vpop.permute.xlu0 %1957
  %1959 = vrot.lane.b32.xlu0 %v571, 111
  %v1960 = vpop.permute.xlu0 %1959
  %1961 = vrot.lane.b32.xlu0 %v575, 111
  %v1962 = vpop.permute.xlu0 %1961
  %1963 = vrot.lane.b32.xlu0 %v579, 111
  %v1964 = vpop.permute.xlu0 %1963
  %1965 = vrot.lane.b32.xlu0 %v560, 111
  %v1966 = vpop.permute.xlu0 %1965
  %1967 = vrot.lane.b32.xlu0 %v564, 111
  %v1968 = vpop.permute.xlu0 %1967
  %1969 = vrot.lane.b32.xlu0 %v568, 111
  %v1970 = vpop.permute.xlu0 %1969
  %1971 = vrot.lane.b32.xlu0 %v572, 111
  %v1972 = vpop.permute.xlu0 %1971
  %1973 = vrot.lane.b32.xlu0 %v576, 111
  %v1974 = vpop.permute.xlu0 %1973
  %1975 = vrot.lane.b32.xlu0 %v580, 111
  %v1976 = vpop.permute.xlu0 %1975
  %1977 = vrot.lane.b32.xlu0 %v561, 111
  %v1978 = vpop.permute.xlu0 %1977
  %1979 = vrot.lane.b32.xlu0 %v565, 111
  %v1980 = vpop.permute.xlu0 %1979
  %1981 = vrot.lane.b32.xlu0 %v569, 111
  %v1982 = vpop.permute.xlu0 %1981
  %1983 = vrot.lane.b32.xlu0 %v573, 111
  %v1984 = vpop.permute.xlu0 %1983
  %1985 = vrot.lane.b32.xlu0 %v577, 111
  %v1986 = vpop.permute.xlu0 %1985
  %1987 = vrot.lane.b32.xlu0 %v581, 111
  %v1988 = vpop.permute.xlu0 %1987
  %vm1989 = vcmp.lt.s32.totalorder %v604, 111
  %v1990 = vsel %vm1989, %v1966, %v1978
  %v1991 = vsel %vm1989, %v1968, %v1980
  %v1992 = vsel %vm1989, %v1970, %v1982
  %v1993 = vsel %vm1989, %v1972, %v1984
  %v1994 = vsel %vm1989, %v1974, %v1986
  %v1995 = vsel %vm1989, %v1976, %v1988
  %v1996 = vsel %vm1989, %v1954, %v1966
  %v1997 = vsel %vm1989, %v1956, %v1968
  %v1998 = vsel %vm1989, %v1958, %v1970
  %v1999 = vsel %vm1989, %v1960, %v1972
  %v2000 = vsel %vm1989, %v1962, %v1974
  %v2001 = vsel %vm1989, %v1964, %v1976
  %v2002 = vsel %vm1989, %v1942, %v1954
  %v2003 = vsel %vm1989, %v1944, %v1956
  %v2004 = vsel %vm1989, %v1946, %v1958
  %v2005 = vsel %vm1989, %v1948, %v1960
  %v2006 = vsel %vm1989, %v1950, %v1962
  %v2007 = vsel %vm1989, %v1952, %v1964
  %v2008 = vsel %vm1989, %v1978, %v1942
  %v2009 = vsel %vm1989, %v1980, %v1944
  %v2010 = vsel %vm1989, %v1982, %v1946
  %v2011 = vsel %vm1989, %v1984, %v1948
  %v2012 = vsel %vm1989, %v1986, %v1950
  %v2013 = vsel %vm1989, %v1988, %v1952
  %2014 = vset.pattern.permute.xlu0 8
  %2015 = vperm.xlu0 %2014, %v582
  %v2016 = vpop.permute.xlu0 %2015
  %2018 = vset.pattern.permute.xlu0 8
  %2019 = vperm.xlu0 %2018, %v583
  %v2020 = vpop.permute.xlu0 %2019
  %2022 = vset.pattern.permute.xlu0 8
  %2023 = vperm.xlu0 %2022, %v584
  %v2024 = vpop.permute.xlu0 %2023
  %2026 = vset.pattern.permute.xlu0 8
  %2027 = vperm.xlu0 %2026, %v585
  %v2028 = vpop.permute.xlu0 %2027
  %2030 = vset.pattern.permute.xlu0 8
  %2031 = vperm.xlu0 %2030, %v586
  %v2032 = vpop.permute.xlu0 %2031
  %2034 = vset.pattern.permute.xlu0 8
  %2035 = vperm.xlu0 %2034, %v587
  %v2036 = vpop.permute.xlu0 %2035
  %v2038 = vmul.f32 %v2002, %v2016
  %v2039 = vmul.f32 %v1996, %v2016
  %v2040 = vmul.f32 %v1990, %v2016
  %v2041 = vmul.f32 %v2008, %v2016
  %v2042 = vmul.f32 %v2003, %v2020
  %v2043 = vmul.f32 %v1997, %v2020
  %v2044 = vmul.f32 %v1991, %v2020
  %v2045 = vmul.f32 %v2009, %v2020
  %v2046 = vmul.f32 %v2004, %v2024
  %v2047 = vmul.f32 %v1998, %v2024
  %v2048 = vmul.f32 %v1992, %v2024
  %v2049 = vmul.f32 %v2010, %v2024
  %v2050 = vmul.f32 %v2005, %v2028
  %v2051 = vmul.f32 %v1999, %v2028
  %v2052 = vmul.f32 %v1993, %v2028
  %v2053 = vmul.f32 %v2011, %v2028
  %v2054 = vmul.f32 %v2006, %v2032
  %v2055 = vmul.f32 %v2000, %v2032
  %v2056 = vmul.f32 %v1994, %v2032
  %v2057 = vmul.f32 %v2012, %v2032
  %v2058 = vmul.f32 %v2007, %v2036
  %v2059 = vmul.f32 %v2001, %v2036
  %v2060 = vmul.f32 %v1995, %v2036
  %v2061 = vmul.f32 %v2013, %v2036
  %v2062 = vmul.f32 %v2038, %v748
  %v2063 = vmul.f32 %v2039, %v749
  %v2064 = vmul.f32 %v2040, %v750
  %v2065 = vmul.f32 %v2041, %v751
  %v2066 = vmul.f32 %v2042, %v748
  %v2067 = vmul.f32 %v2043, %v749
  %v2068 = vmul.f32 %v2044, %v750
  %v2069 = vmul.f32 %v2045, %v751
  %v2070 = vmul.f32 %v2046, %v748
  %v2071 = vmul.f32 %v2047, %v749
  %v2072 = vmul.f32 %v2048, %v750
  %v2073 = vmul.f32 %v2049, %v751
  %v2074 = vmul.f32 %v2050, %v748
  %v2075 = vmul.f32 %v2051, %v749
  %v2076 = vmul.f32 %v2052, %v750
  %v2077 = vmul.f32 %v2053, %v751
  %v2078 = vmul.f32 %v2054, %v748
  %v2079 = vmul.f32 %v2055, %v749
  %v2080 = vmul.f32 %v2056, %v750
  %v2081 = vmul.f32 %v2057, %v751
  %v2082 = vmul.f32 %v2058, %v748
  %v2083 = vmul.f32 %v2059, %v749
  %v2084 = vmul.f32 %v2060, %v750
  %v2085 = vmul.f32 %v2061, %v751
  %v2086 = vadd.f32 %v1917, %v2062
  %v2087 = vadd.f32 %v1918, %v2063
  %v2088 = vadd.f32 %v1919, %v2064
  %v2089 = vadd.f32 %v1920, %v2065
  %v2090 = vadd.f32 %v1921, %v2066
  %v2091 = vadd.f32 %v1922, %v2067
  %v2092 = vadd.f32 %v1923, %v2068
  %v2093 = vadd.f32 %v1924, %v2069
  %v2094 = vadd.f32 %v1925, %v2070
  %v2095 = vadd.f32 %v1926, %v2071
  %v2096 = vadd.f32 %v1927, %v2072
  %v2097 = vadd.f32 %v1928, %v2073
  %v2098 = vadd.f32 %v1929, %v2074
  %v2099 = vadd.f32 %v1930, %v2075
  %v2100 = vadd.f32 %v1931, %v2076
  %v2101 = vadd.f32 %v1932, %v2077
  %v2102 = vadd.f32 %v1933, %v2078
  %v2103 = vadd.f32 %v1934, %v2079
  %v2104 = vadd.f32 %v1935, %v2080
  %v2105 = vadd.f32 %v1936, %v2081
  %v2106 = vadd.f32 %v1937, %v2082
  %v2107 = vadd.f32 %v1938, %v2083
  %v2108 = vadd.f32 %v1939, %v2084
  %v2109 = vadd.f32 %v1940, %v2085
  %v2110 = vmul.f32 %v2086, %v724
  %v2111 = vmul.f32 %v2087, %v725
  %v2112 = vmul.f32 %v2088, %v726
  %v2113 = vmul.f32 %v2089, %v727
  %v2114 = vmul.f32 %v2090, %v724
  %v2115 = vmul.f32 %v2091, %v725
  %v2116 = vmul.f32 %v2092, %v726
  %v2117 = vmul.f32 %v2093, %v727
  %v2118 = vmul.f32 %v2094, %v724
  %v2119 = vmul.f32 %v2095, %v725
  %v2120 = vmul.f32 %v2096, %v726
  %v2121 = vmul.f32 %v2097, %v727
  %v2122 = vmul.f32 %v2098, %v724
  %v2123 = vmul.f32 %v2099, %v725
  %v2124 = vmul.f32 %v2100, %v726
  %v2125 = vmul.f32 %v2101, %v727
  %v2126 = vmul.f32 %v2102, %v724
  %v2127 = vmul.f32 %v2103, %v725
  %v2128 = vmul.f32 %v2104, %v726
  %v2129 = vmul.f32 %v2105, %v727
  %v2130 = vmul.f32 %v2106, %v724
  %v2131 = vmul.f32 %v2107, %v725
  %v2132 = vmul.f32 %v2108, %v726
  %v2133 = vmul.f32 %v2109, %v727
  %v2134 = vadd.f32 %v1627, %v2110
  %v2135 = vadd.f32 %v1628, %v2111
  %v2136 = vadd.f32 %v1629, %v2112
  %v2137 = vadd.f32 %v1630, %v2113
  %v2138 = vadd.f32 %v1631, %v2114
  %v2139 = vadd.f32 %v1632, %v2115
  %v2140 = vadd.f32 %v1633, %v2116
  %v2141 = vadd.f32 %v1634, %v2117
  %v2142 = vadd.f32 %v1635, %v2118
  %v2143 = vadd.f32 %v1636, %v2119
  %v2144 = vadd.f32 %v1637, %v2120
  %v2145 = vadd.f32 %v1638, %v2121
  %v2146 = vadd.f32 %v1639, %v2122
  %v2147 = vadd.f32 %v1640, %v2123
  %v2148 = vadd.f32 %v1641, %v2124
  %v2149 = vadd.f32 %v1642, %v2125
  %v2150 = vadd.f32 %v1643, %v2126
  %v2151 = vadd.f32 %v1644, %v2127
  %v2152 = vadd.f32 %v1645, %v2128
  %v2153 = vadd.f32 %v1646, %v2129
  %v2154 = vadd.f32 %v1647, %v2130
  %v2155 = vadd.f32 %v1648, %v2131
  %v2156 = vadd.f32 %v1649, %v2132
  %v2157 = vadd.f32 %v1650, %v2133
  %v2158 = vadd.f32 %v2134, %v2135
  %v2159 = vadd.f32 %v2158, %v2136
  %v2160 = vadd.f32 %v2159, %v2137
  %2161 = vadd.xlane.f32.xlu0 %v2160
  %v2162 = vpop.xlane.xlu0 %2161
  %v2163 = vadd.f32 %v2138, %v2139
  %v2164 = vadd.f32 %v2163, %v2140
  %v2165 = vadd.f32 %v2164, %v2141
  %2166 = vadd.xlane.f32.xlu0 %v2165
  %v2167 = vpop.xlane.xlu0 %2166
  %v2168 = vadd.f32 %v2142, %v2143
  %v2169 = vadd.f32 %v2168, %v2144
  %v2170 = vadd.f32 %v2169, %v2145
  %2171 = vadd.xlane.f32.xlu0 %v2170
  %v2172 = vpop.xlane.xlu0 %2171
  %v2173 = vadd.f32 %v2146, %v2147
  %v2174 = vadd.f32 %v2173, %v2148
  %v2175 = vadd.f32 %v2174, %v2149
  %2176 = vadd.xlane.f32.xlu0 %v2175
  %v2177 = vpop.xlane.xlu0 %2176
  %v2178 = vadd.f32 %v2150, %v2151
  %v2179 = vadd.f32 %v2178, %v2152
  %v2180 = vadd.f32 %v2179, %v2153
  %2181 = vadd.xlane.f32.xlu0 %v2180
  %v2182 = vpop.xlane.xlu0 %2181
  %v2183 = vadd.f32 %v2154, %v2155
  %v2184 = vadd.f32 %v2183, %v2156
  %v2185 = vadd.f32 %v2184, %v2157
  %2186 = vadd.xlane.f32.xlu0 %v2185
  %v2187 = vpop.xlane.xlu0 %2186
  %v2188 = vmul.f32 %v2162, 0.001953125
  %v2189 = vmul.f32 %v2167, 0.001953125
  %v2190 = vmul.f32 %v2172, 0.001953125
  %v2191 = vmul.f32 %v2177, 0.001953125
  %v2192 = vmul.f32 %v2182, 0.001953125
  %v2193 = vmul.f32 %v2187, 0.001953125
  %v2194 = vsub.f32 %v2134, %v2188
  %v2195 = vsub.f32 %v2135, %v2188
  %v2196 = vsub.f32 %v2136, %v2188
  %v2197 = vsub.f32 %v2137, %v2188
  %v2198 = vsub.f32 %v2138, %v2189
  %v2199 = vsub.f32 %v2139, %v2189
  %v2200 = vsub.f32 %v2140, %v2189
  %v2201 = vsub.f32 %v2141, %v2189
  %v2202 = vsub.f32 %v2142, %v2190
  %v2203 = vsub.f32 %v2143, %v2190
  %v2204 = vsub.f32 %v2144, %v2190
  %v2205 = vsub.f32 %v2145, %v2190
  %v2206 = vsub.f32 %v2146, %v2191
  %v2207 = vsub.f32 %v2147, %v2191
  %v2208 = vsub.f32 %v2148, %v2191
  %v2209 = vsub.f32 %v2149, %v2191
  %v2210 = vsub.f32 %v2150, %v2192
  %v2211 = vsub.f32 %v2151, %v2192
  %v2212 = vsub.f32 %v2152, %v2192
  %v2213 = vsub.f32 %v2153, %v2192
  %v2214 = vsub.f32 %v2154, %v2193
  %v2215 = vsub.f32 %v2155, %v2193
  %v2216 = vsub.f32 %v2156, %v2193
  %v2217 = vsub.f32 %v2157, %v2193
  %v2218 = vmul.f32 %v2194, %v2194
  %v2219 = vmul.f32 %v2195, %v2195
  %v2220 = vmul.f32 %v2196, %v2196
  %v2221 = vmul.f32 %v2197, %v2197
  %v2222 = vmul.f32 %v2198, %v2198
  %v2223 = vmul.f32 %v2199, %v2199
  %v2224 = vmul.f32 %v2200, %v2200
  %v2225 = vmul.f32 %v2201, %v2201
  %v2226 = vmul.f32 %v2202, %v2202
  %v2227 = vmul.f32 %v2203, %v2203
  %v2228 = vmul.f32 %v2204, %v2204
  %v2229 = vmul.f32 %v2205, %v2205
  %v2230 = vmul.f32 %v2206, %v2206
  %v2231 = vmul.f32 %v2207, %v2207
  %v2232 = vmul.f32 %v2208, %v2208
  %v2233 = vmul.f32 %v2209, %v2209
  %v2234 = vmul.f32 %v2210, %v2210
  %v2235 = vmul.f32 %v2211, %v2211
  %v2236 = vmul.f32 %v2212, %v2212
  %v2237 = vmul.f32 %v2213, %v2213
  %v2238 = vmul.f32 %v2214, %v2214
  %v2239 = vmul.f32 %v2215, %v2215
  %v2240 = vmul.f32 %v2216, %v2216
  %v2241 = vmul.f32 %v2217, %v2217
  %v2242 = vadd.f32 %v2218, %v2219
  %v2243 = vadd.f32 %v2242, %v2220
  %v2244 = vadd.f32 %v2243, %v2221
  %2245 = vadd.xlane.f32.xlu0 %v2244
  %v2246 = vpop.xlane.xlu0 %2245
  %v2247 = vadd.f32 %v2222, %v2223
  %v2248 = vadd.f32 %v2247, %v2224
  %v2249 = vadd.f32 %v2248, %v2225
  %2250 = vadd.xlane.f32.xlu0 %v2249
  %v2251 = vpop.xlane.xlu0 %2250
  %v2252 = vadd.f32 %v2226, %v2227
  %v2253 = vadd.f32 %v2252, %v2228
  %v2254 = vadd.f32 %v2253, %v2229
  %2255 = vadd.xlane.f32.xlu0 %v2254
  %v2256 = vpop.xlane.xlu0 %2255
  %v2257 = vadd.f32 %v2230, %v2231
  %v2258 = vadd.f32 %v2257, %v2232
  %v2259 = vadd.f32 %v2258, %v2233
  %2260 = vadd.xlane.f32.xlu0 %v2259
  %v2261 = vpop.xlane.xlu0 %2260
  %v2262 = vadd.f32 %v2234, %v2235
  %v2263 = vadd.f32 %v2262, %v2236
  %v2264 = vadd.f32 %v2263, %v2237
  %2265 = vadd.xlane.f32.xlu0 %v2264
  %v2266 = vpop.xlane.xlu0 %2265
  %v2267 = vadd.f32 %v2238, %v2239
  %v2268 = vadd.f32 %v2267, %v2240
  %v2269 = vadd.f32 %v2268, %v2241
  %2270 = vadd.xlane.f32.xlu0 %v2269
  %v2271 = vpop.xlane.xlu0 %2270
  %v2272 = vmul.f32 %v2246, 0.001953125
  %v2273 = vmul.f32 %v2251, 0.001953125
  %v2274 = vmul.f32 %v2256, 0.001953125
  %v2275 = vmul.f32 %v2261, 0.001953125
  %v2276 = vmul.f32 %v2266, 0.001953125
  %v2277 = vmul.f32 %v2271, 0.001953125
  %v2278 = vadd.f32 %v2272, 1e-05
  %v2279 = vadd.f32 %v2273, 1e-05
  %v2280 = vadd.f32 %v2274, 1e-05
  %v2281 = vadd.f32 %v2275, 1e-05
  %v2282 = vadd.f32 %v2276, 1e-05
  %v2283 = vadd.f32 %v2277, 1e-05
  %v2284 = vrsqrt.pop %v2278
  %v2285 = vmul.f32 %v2284, %v2278
  %v2286 = vmul.f32 %v2285, %v2284
  %v2287 = vmul.f32 0.5, %v2286
  %v2288 = vsub.f32 1.5, %v2287
  %v2289 = vmul.f32 %v2284, %v2288
  %vm2290 = vweird.f32 %v2278
  %vm2291 = vweird.f32 %v2284
  %vm2292 = vmor %vm2290, %vm2291
  %v2293 = vsel %vm2292, %v2284, %v2289
  %v2294 = vrsqrt.pop %v2279
  %v2295 = vmul.f32 %v2294, %v2279
  %v2296 = vmul.f32 %v2295, %v2294
  %v2297 = vmul.f32 0.5, %v2296
  %v2298 = vsub.f32 1.5, %v2297
  %v2299 = vmul.f32 %v2294, %v2298
  %vm2300 = vweird.f32 %v2279
  %vm2301 = vweird.f32 %v2294
  %vm2302 = vmor %vm2300, %vm2301
  %v2303 = vsel %vm2302, %v2294, %v2299
  %v2304 = vrsqrt.pop %v2280
  %v2305 = vmul.f32 %v2304, %v2280
  %v2306 = vmul.f32 %v2305, %v2304
  %v2307 = vmul.f32 0.5, %v2306
  %v2308 = vsub.f32 1.5, %v2307
  %v2309 = vmul.f32 %v2304, %v2308
  %vm2310 = vweird.f32 %v2280
  %vm2311 = vweird.f32 %v2304
  %vm2312 = vmor %vm2310, %vm2311
  %v2313 = vsel %vm2312, %v2304, %v2309
  %v2314 = vrsqrt.pop %v2281
  %v2315 = vmul.f32 %v2314, %v2281
  %v2316 = vmul.f32 %v2315, %v2314
  %v2317 = vmul.f32 0.5, %v2316
  %v2318 = vsub.f32 1.5, %v2317
  %v2319 = vmul.f32 %v2314, %v2318
  %vm2320 = vweird.f32 %v2281
  %vm2321 = vweird.f32 %v2314
  %vm2322 = vmor %vm2320, %vm2321
  %v2323 = vsel %vm2322, %v2314, %v2319
  %v2324 = vrsqrt.pop %v2282
  %v2325 = vmul.f32 %v2324, %v2282
  %v2326 = vmul.f32 %v2325, %v2324
  %v2327 = vmul.f32 0.5, %v2326
  %v2328 = vsub.f32 1.5, %v2327
  %v2329 = vmul.f32 %v2324, %v2328
  %vm2330 = vweird.f32 %v2282
  %vm2331 = vweird.f32 %v2324
  %vm2332 = vmor %vm2330, %vm2331
  %v2333 = vsel %vm2332, %v2324, %v2329
  %v2334 = vrsqrt.pop %v2283
  %v2335 = vmul.f32 %v2334, %v2283
  %v2336 = vmul.f32 %v2335, %v2334
  %v2337 = vmul.f32 0.5, %v2336
  %v2338 = vsub.f32 1.5, %v2337
  %v2339 = vmul.f32 %v2334, %v2338
  %vm2340 = vweird.f32 %v2283
  %vm2341 = vweird.f32 %v2334
  %vm2342 = vmor %vm2340, %vm2341
  %v2343 = vsel %vm2342, %v2334, %v2339
  %v2344 = vmul.f32 %v2194, %v2293
  %v2345 = vmul.f32 %v2195, %v2293
  %v2346 = vmul.f32 %v2196, %v2293
  %v2347 = vmul.f32 %v2197, %v2293
  %v2348 = vmul.f32 %v2198, %v2303
  %v2349 = vmul.f32 %v2199, %v2303
  %v2350 = vmul.f32 %v2200, %v2303
  %v2351 = vmul.f32 %v2201, %v2303
  %v2352 = vmul.f32 %v2202, %v2313
  %v2353 = vmul.f32 %v2203, %v2313
  %v2354 = vmul.f32 %v2204, %v2313
  %v2355 = vmul.f32 %v2205, %v2313
  %v2356 = vmul.f32 %v2206, %v2323
  %v2357 = vmul.f32 %v2207, %v2323
  %v2358 = vmul.f32 %v2208, %v2323
  %v2359 = vmul.f32 %v2209, %v2323
  %v2360 = vmul.f32 %v2210, %v2333
  %v2361 = vmul.f32 %v2211, %v2333
  %v2362 = vmul.f32 %v2212, %v2333
  %v2363 = vmul.f32 %v2213, %v2333
  %v2364 = vmul.f32 %v2214, %v2343
  %v2365 = vmul.f32 %v2215, %v2343
  %v2366 = vmul.f32 %v2216, %v2343
  %v2367 = vmul.f32 %v2217, %v2343
  %2369 = vset.pattern.permute.xlu0 0
  %2370 = vperm.xlu0 %2369, %v588
  %v2371 = vpop.permute.xlu0 %2370
  %2374 = vset.pattern.permute.xlu0 0
  %2375 = vperm.xlu0 %2374, %v589
  %v2376 = vpop.permute.xlu0 %2375
  %2379 = vset.pattern.permute.xlu0 0
  %2380 = vperm.xlu0 %2379, %v590
  %v2381 = vpop.permute.xlu0 %2380
  %2384 = vset.pattern.permute.xlu0 0
  %2385 = vperm.xlu0 %2384, %v591
  %v2386 = vpop.permute.xlu0 %2385
  %2389 = vset.pattern.permute.xlu0 0
  %2390 = vperm.xlu0 %2389, %v592
  %v2391 = vpop.permute.xlu0 %2390
  %2394 = vset.pattern.permute.xlu0 0
  %2395 = vperm.xlu0 %2394, %v593
  %v2396 = vpop.permute.xlu0 %2395
  %v2398 = vmul.f32 %v2344, %v2371
  %v2399 = vmul.f32 %v2345, %v2371
  %v2400 = vmul.f32 %v2346, %v2371
  %v2401 = vmul.f32 %v2347, %v2371
  %v2402 = vmul.f32 %v2348, %v2376
  %v2403 = vmul.f32 %v2349, %v2376
  %v2404 = vmul.f32 %v2350, %v2376
  %v2405 = vmul.f32 %v2351, %v2376
  %v2406 = vmul.f32 %v2352, %v2381
  %v2407 = vmul.f32 %v2353, %v2381
  %v2408 = vmul.f32 %v2354, %v2381
  %v2409 = vmul.f32 %v2355, %v2381
  %v2410 = vmul.f32 %v2356, %v2386
  %v2411 = vmul.f32 %v2357, %v2386
  %v2412 = vmul.f32 %v2358, %v2386
  %v2413 = vmul.f32 %v2359, %v2386
  %v2414 = vmul.f32 %v2360, %v2391
  %v2415 = vmul.f32 %v2361, %v2391
  %v2416 = vmul.f32 %v2362, %v2391
  %v2417 = vmul.f32 %v2363, %v2391
  %v2418 = vmul.f32 %v2364, %v2396
  %v2419 = vmul.f32 %v2365, %v2396
  %v2420 = vmul.f32 %v2366, %v2396
  %v2421 = vmul.f32 %v2367, %v2396
  %2423 = vset.pattern.permute.xlu0 0
  %2424 = vperm.xlu0 %2423, %v594
  %v2425 = vpop.permute.xlu0 %2424
  %2428 = vset.pattern.permute.xlu0 0
  %2429 = vperm.xlu0 %2428, %v595
  %v2430 = vpop.permute.xlu0 %2429
  %2433 = vset.pattern.permute.xlu0 0
  %2434 = vperm.xlu0 %2433, %v596
  %v2435 = vpop.permute.xlu0 %2434
  %2438 = vset.pattern.permute.xlu0 0
  %2439 = vperm.xlu0 %2438, %v597
  %v2440 = vpop.permute.xlu0 %2439
  %2443 = vset.pattern.permute.xlu0 0
  %2444 = vperm.xlu0 %2443, %v598
  %v2445 = vpop.permute.xlu0 %2444
  %2448 = vset.pattern.permute.xlu0 0
  %2449 = vperm.xlu0 %2448, %v599
  %v2450 = vpop.permute.xlu0 %2449
  %v2452 = vadd.f32 %v2398, %v2425
  %v2453 = vadd.f32 %v2399, %v2425
  %v2454 = vadd.f32 %v2400, %v2425
  %v2455 = vadd.f32 %v2401, %v2425
  %v2456 = vadd.f32 %v2402, %v2430
  %v2457 = vadd.f32 %v2403, %v2430
  %v2458 = vadd.f32 %v2404, %v2430
  %v2459 = vadd.f32 %v2405, %v2430
  %v2460 = vadd.f32 %v2406, %v2435
  %v2461 = vadd.f32 %v2407, %v2435
  %v2462 = vadd.f32 %v2408, %v2435
  %v2463 = vadd.f32 %v2409, %v2435
  %v2464 = vadd.f32 %v2410, %v2440
  %v2465 = vadd.f32 %v2411, %v2440
  %v2466 = vadd.f32 %v2412, %v2440
  %v2467 = vadd.f32 %v2413, %v2440
  %v2468 = vadd.f32 %v2414, %v2445
  %v2469 = vadd.f32 %v2415, %v2445
  %v2470 = vadd.f32 %v2416, %v2445
  %v2471 = vadd.f32 %v2417, %v2445
  %v2472 = vadd.f32 %v2418, %v2450
  %v2473 = vadd.f32 %v2419, %v2450
  %v2474 = vadd.f32 %v2420, %v2450
  %v2475 = vadd.f32 %v2421, %v2450
  %v2476 = vmax.f32 %v2452, 0.0
  %v2477 = vmax.f32 %v2453, 0.0
  %v2478 = vmax.f32 %v2454, 0.0
  %v2479 = vmax.f32 %v2455, 0.0
  %v2480 = vmax.f32 %v2456, 0.0
  %v2481 = vmax.f32 %v2457, 0.0
  %v2482 = vmax.f32 %v2458, 0.0
  %v2483 = vmax.f32 %v2459, 0.0
  %v2484 = vmax.f32 %v2460, 0.0
  %v2485 = vmax.f32 %v2461, 0.0
  %v2486 = vmax.f32 %v2462, 0.0
  %v2487 = vmax.f32 %v2463, 0.0
  %v2488 = vmax.f32 %v2464, 0.0
  %v2489 = vmax.f32 %v2465, 0.0
  %v2490 = vmax.f32 %v2466, 0.0
  %v2491 = vmax.f32 %v2467, 0.0
  %v2492 = vmax.f32 %v2468, 0.0
  %v2493 = vmax.f32 %v2469, 0.0
  %v2494 = vmax.f32 %v2470, 0.0
  %v2495 = vmax.f32 %v2471, 0.0
  %v2496 = vmax.f32 %v2472, 0.0
  %v2497 = vmax.f32 %v2473, 0.0
  %v2498 = vmax.f32 %v2474, 0.0
  %v2499 = vmax.f32 %v2475, 0.0
  %v2500 = vmin.f32 %v2476, 6.0
  %v2501 = vmin.f32 %v2477, 6.0
  %v2502 = vmin.f32 %v2478, 6.0
  %v2503 = vmin.f32 %v2479, 6.0
  %v2504 = vmin.f32 %v2480, 6.0
  %v2505 = vmin.f32 %v2481, 6.0
  %v2506 = vmin.f32 %v2482, 6.0
  %v2507 = vmin.f32 %v2483, 6.0
  %v2508 = vmin.f32 %v2484, 6.0
  %v2509 = vmin.f32 %v2485, 6.0
  %v2510 = vmin.f32 %v2486, 6.0
  %v2511 = vmin.f32 %v2487, 6.0
  %v2512 = vmin.f32 %v2488, 6.0
  %v2513 = vmin.f32 %v2489, 6.0
  %v2514 = vmin.f32 %v2490, 6.0
  %v2515 = vmin.f32 %v2491, 6.0
  %v2516 = vmin.f32 %v2492, 6.0
  %v2517 = vmin.f32 %v2493, 6.0
  %v2518 = vmin.f32 %v2494, 6.0
  %v2519 = vmin.f32 %v2495, 6.0
  %v2520 = vmin.f32 %v2496, 6.0
  %v2521 = vmin.f32 %v2497, 6.0
  %v2522 = vmin.f32 %v2498, 6.0
  %v2523 = vmin.f32 %v2499, 6.0
  %vm2524 = vcmask 392192
  %v2526 = vsel %vm2524, %v600, 0
  %2528 = vmatpush.msra.mxu0 0.0
  %2529 = vmatpush.msra.mxu0 0.0
  %2530 = vmatpush.msra.mxu0 0.0
  %2531 = vmatpush.msra.mxu0 0.0
  %2532 = vmatpush.msra.mxu0 0.0
  %2533 = vmatpush.msra.mxu0 0.0
  %2534 = vmatpush.msra.mxu0 0.0
  %2535 = vmatpush.msra.mxu0 0.0
  %2536 = vmatpush.msra.mxu0 0.0
  %2537 = vmatpush.msra.mxu0 0.0
  %2538 = vmatpush.msra.mxu0 %v2520
  %2539 = vmatpush.msra.mxu0 %v2516
  %2540 = vmatpush.msra.mxu0 %v2512
  %2541 = vmatpush.msra.mxu0 %v2508
  %2542 = vmatpush.msra.mxu0 %v2504
  %2543 = vmatpush.msra.mxu0 %v2500
  %2544 = vmatmul.f32.gmra.mxu0 %v2526
  %v2545 = vpop.f32.mrf.mxu0
  %v2546 = vadd.f32 0.0, %v2545
  %2547 = vdwg.mxu0
  %2548 = vmatpush.msra.mxu0 0.0
  %2549 = vmatpush.msra.mxu0 0.0
  %2550 = vmatpush.msra.mxu0 0.0
  %2551 = vmatpush.msra.mxu0 0.0
  %2552 = vmatpush.msra.mxu0 0.0
  %2553 = vmatpush.msra.mxu0 0.0
  %2554 = vmatpush.msra.mxu0 0.0
  %2555 = vmatpush.msra.mxu0 0.0
  %2556 = vmatpush.msra.mxu0 0.0
  %2557 = vmatpush.msra.mxu0 0.0
  %2558 = vmatpush.msra.mxu0 %v2521
  %2559 = vmatpush.msra.mxu0 %v2517
  %2560 = vmatpush.msra.mxu0 %v2513
  %2561 = vmatpush.msra.mxu0 %v2509
  %2562 = vmatpush.msra.mxu0 %v2505
  %2563 = vmatpush.msra.mxu0 %v2501
  %2564 = vmatmul.f32.gmra.mxu0 %v2526
  %v2565 = vpop.f32.mrf.mxu0
  %v2566 = vadd.f32 0.0, %v2565
  %2567 = vdwg.mxu0
  %2568 = vmatpush.msra.mxu0 0.0
  %2569 = vmatpush.msra.mxu0 0.0
  %2570 = vmatpush.msra.mxu0 0.0
  %2571 = vmatpush.msra.mxu0 0.0
  %2572 = vmatpush.msra.mxu0 0.0
  %2573 = vmatpush.msra.mxu0 0.0
  %2574 = vmatpush.msra.mxu0 0.0
  %2575 = vmatpush.msra.mxu0 0.0
  %2576 = vmatpush.msra.mxu0 0.0
  %2577 = vmatpush.msra.mxu0 0.0
  %2578 = vmatpush.msra.mxu0 %v2522
  %2579 = vmatpush.msra.mxu0 %v2518
  %2580 = vmatpush.msra.mxu0 %v2514
  %2581 = vmatpush.msra.mxu0 %v2510
  %2582 = vmatpush.msra.mxu0 %v2506
  %2583 = vmatpush.msra.mxu0 %v2502
  %2584 = vmatmul.f32.gmra.mxu0 %v2526
  %v2585 = vpop.f32.mrf.mxu0
  %v2586 = vadd.f32 0.0, %v2585
  %2587 = vdwg.mxu0
  %2588 = vmatpush.msra.mxu0 0.0
  %2589 = vmatpush.msra.mxu0 0.0
  %2590 = vmatpush.msra.mxu0 0.0
  %2591 = vmatpush.msra.mxu0 0.0
  %2592 = vmatpush.msra.mxu0 0.0
  %2593 = vmatpush.msra.mxu0 0.0
  %2594 = vmatpush.msra.mxu0 0.0
  %2595 = vmatpush.msra.mxu0 0.0
  %2596 = vmatpush.msra.mxu0 0.0
  %2597 = vmatpush.msra.mxu0 0.0
  %2598 = vmatpush.msra.mxu0 %v2523
  %2599 = vmatpush.msra.mxu0 %v2519
  %2600 = vmatpush.msra.mxu0 %v2515
  %2601 = vmatpush.msra.mxu0 %v2511
  %2602 = vmatpush.msra.mxu0 %v2507
  %2603 = vmatpush.msra.mxu0 %v2503
  %2604 = vmatmul.f32.gmra.mxu0 %v2526
  %v2605 = vpop.f32.mrf.mxu0
  %v2606 = vadd.f32 0.0, %v2605
  %2607 = vdwg.mxu0
  %v2608 = vadd.f32 %v2546, %v2566
  %v2609 = vadd.f32 %v2608, %v2586
  %v2610 = vadd.f32 %v2609, %v2606
  %2611 = vadd.xlane.f32.xlu0 %v2610
  %v2612 = vpop.xlane.xlu0 %2611
  %v2613 = vmul.f32 %v2612, 0.001953125
  %v2614 = vsub.f32 %v2546, %v2613
  %v2615 = vsub.f32 %v2566, %v2613
  %v2616 = vsub.f32 %v2586, %v2613
  %v2617 = vsub.f32 %v2606, %v2613
  %v2618 = vmul.f32 %v2614, %v2614
  %v2619 = vmul.f32 %v2615, %v2615
  %v2620 = vmul.f32 %v2616, %v2616
  %v2621 = vmul.f32 %v2617, %v2617
  %v2622 = vadd.f32 %v2618, %v2619
  %v2623 = vadd.f32 %v2622, %v2620
  %v2624 = vadd.f32 %v2623, %v2621
  %2625 = vadd.xlane.f32.xlu0 %v2624
  %v2626 = vpop.xlane.xlu0 %2625
  %v2627 = vmul.f32 %v2626, 0.001953125
  %v2628 = vadd.f32 %v2627, 1e-05
  %v2629 = vrsqrt.pop %v2628
  %v2630 = vmul.f32 %v2629, %v2628
  %v2631 = vmul.f32 %v2630, %v2629
  %v2632 = vmul.f32 0.5, %v2631
  %v2633 = vsub.f32 1.5, %v2632
  %v2634 = vmul.f32 %v2629, %v2633
  %vm2635 = vweird.f32 %v2628
  %vm2636 = vweird.f32 %v2629
  %vm2637 = vmor %vm2635, %vm2636
  %v2638 = vsel %vm2637, %v2629, %v2634
  %v2639 = vmul.f32 %v2614, %v2638
  %v2640 = vmul.f32 %v2615, %v2638
  %v2641 = vmul.f32 %v2616, %v2638
  %v2642 = vmul.f32 %v2617, %v2638
  %2644 = vset.pattern.permute.xlu0 0
  %2645 = vperm.xlu0 %2644, %v601
  %v2646 = vpop.permute.xlu0 %2645
  %v2648 = vmul.f32 %v2639, %v2646
  %v2649 = vmul.f32 %v2640, %v2646
  %v2650 = vmul.f32 %v2641, %v2646
  %v2651 = vmul.f32 %v2642, %v2646
  %2653 = vset.pattern.permute.xlu0 0
  %2654 = vperm.xlu0 %2653, %v602
  %v2655 = vpop.permute.xlu0 %2654
  %v2657 = vadd.f32 %v2648, %v2655
  %v2658 = vadd.f32 %v2649, %v2655
  %v2659 = vadd.f32 %v2650, %v2655
  %v2660 = vadd.f32 %v2651, %v2655
  %v2661 = vadd.f32 %v2657, %v35
  %v2662 = vadd.f32 %v2658, %v36
  %v2663 = vadd.f32 %v2659, %v37
  %v2664 = vadd.f32 %v2660, %v38
  %2665 = vst [vmem:[%s10] sm:$0xff] %v2661
  %2666 = vst [vmem:[%s10 + $0x8] sm:$0xff] %v2662
  %2667 = vst [vmem:[%s10 + $0x10] sm:$0xff] %v2663
  %2668 = vst [vmem:[%s10 + $0x18] sm:$0xff] %v2664
  // Predicated region
  $region42: #{inverted_residual_block.1} parent=0 // pred_check
    _
  $region43: #{inverted_residual_block.1} parent=0 // pred_check_branch
    %2670 = sbr.rel (0) target = $region45
  $region44: #{inverted_residual_block.1} parent=0 // pred_region
    _
  $region45: #{inverted_residual_block.1} parent=0 // pred_fallthru
    _
  // Predicated region
  $region46: #{inverted_residual_block.1} parent=0 // pred_check
    _
  $region47: #{inverted_residual_block.1} parent=0 // pred_check_branch
    %2672 = sbr.rel (0) target = $region49
  $region48: #{inverted_residual_block.1} parent=0 // pred_region
    _
  $region49: #{inverted_residual_block.1} parent=0 // pred_fallthru
    _

</llo_original>
